<compile_context>
chip_gen: v7x
topology: tpu7x:2x2x1
jax: 0.10.0
libtpu: 0.0.40
codegen_flags: <defaults>
</compile_context>

<pallas_src>
import numpy as np
import jax
import jax.numpy as jnp
from jax import lax
from jax.experimental import pallas as pl
from jax.experimental.pallas import tpu as pltpu


def _round_up(x, m):
    return ((x + m - 1) // m) * m


def _sigmoid(x):
    # sigmoid via tanh so the transcendental lands on the EUP slot (exact same math).
    return 0.5 * (jnp.tanh(0.5 * x) + 1.0)


# Time loops up to this length are fully unrolled; beyond it use a bounded-unroll fori_loop
# so vreg pressure and code size stop growing with T.
_UNROLL_T = 16
_FORI_UNROLL = 8
# Target row count per hoisted-projection chunk.
_PROJ_ROWS = 512


def gru_kernel(x_ref, wih_ref, whh_ref, bgi_ref, bhn_ref, lens_ref,
               out_ref, hid_ref, gi_ref):
    """One batch-tile of the GRU: hoisted input projection + serial recurrence.

    Time-major layout so every per-step access is a dense (tB, lanes) tile slab.

    x_ref    : (T, tB, I)      mm_dtype   time-major inputs (I = 2*H, unpadded)
    wih_ref  : (I, 3*Hp)       mm_dtype   per-gate lane-padded W_ih^T
    whh_ref  : (Hp, 3*Hp)      mm_dtype   per-gate lane-padded W_hh^T
    bgi_ref  : (1, 3*Hp)       f32        b_ih with b_hr / b_hz folded in
    bhn_ref  : (1, Hp)         f32        n-gate hidden bias (stays inside r*(...))
    lens_ref : (tB, 1)         int32      sequence lengths (0 for batch-padding rows)
    out_ref  : (T, tB, Hp)     f32        per-step hidden states, zero past len[b]
    hid_ref  : (tB, Hp)        f32        final hidden state
    gi_ref   : (T, tB, 3*Hp)   f32        VMEM scratch: hoisted input projection
    """
    T, tB, I = x_ref.shape
    Hp = whh_ref.shape[0]
    mm_dtype = wih_ref.dtype

    # Loop-invariant loads hoisted once.
    wih = wih_ref[...]
    whh = whh_ref[...]
    bgi = bgi_ref[...]
    bhn = bhn_ref[...]
    lens = lens_ref[...]                                     # (tB, 1) int32

    # ---- hoisted input projection: large MXU matmuls covering every timestep, chunked
    # over time so a (T*tB, 3*Hp) f32 value is never materialized in vregs.  Reshapes are
    # layout-free because tB is sublane-aligned for mm_dtype.
    chunk_T = max(1, min(T, _PROJ_ROWS // tB))
    for t0 in range(0, T, chunk_T):
        tc = min(chunk_T, T - t0)
        xc = x_ref[pl.ds(t0, tc)].reshape(tc * tB, I).astype(mm_dtype)
        gic = jnp.dot(xc, wih, preferred_element_type=jnp.float32) + bgi
        gi_ref[pl.ds(t0, tc)] = gic.reshape(tc, tB, 3 * Hp)

    # ---- serial recurrence: only the small (tB, Hp) x (Hp, 3*Hp) matmul stays per step.
    # TODO(synk): latch W_hh in the MXU weight registers across steps via
    #   pltpu.matmul_push_rhs / matmul_acc_lhs / matmul_pop instead of re-pushing the RHS
    #   with a fresh jnp.dot every timestep.
    # TODO(synk): for long T, software-pipeline the projection chunks against the
    #   recurrence (2-chunk gi double buffer) to hide the projection and shrink VMEM (v7x).
    def step(t, h):
        gi_t = gi_ref[t]                                     # (tB, 3*Hp) dense slab
        gh = jnp.dot(h.astype(mm_dtype), whh,
                     preferred_element_type=jnp.float32)
        r = _sigmoid(gi_t[:, 0:Hp] + gh[:, 0:Hp])            # PyTorch gate order: r, z, n
        z = _sigmoid(gi_t[:, Hp:2 * Hp] + gh[:, Hp:2 * Hp])
        n = jnp.tanh(gi_t[:, 2 * Hp:3 * Hp]
                     + r * (gh[:, 2 * Hp:3 * Hp] + bhn))     # b_hn stays inside r*(...)
        h_new = (1.0 - z) * n + z * h

        valid = t < lens                                     # (tB, 1) packed-seq mask
        out_ref[t] = jnp.where(valid, h_new, 0.0)            # dense (tB, Hp) store
        return jnp.where(valid, h_new, h)                    # freeze h past sequence end

    h = jnp.zeros((tB, Hp), jnp.float32)                     # initHidden: zeros
    if T <= _UNROLL_T:
        for t in range(T):
            h = step(t, h)
    else:
        h = lax.fori_loop(0, T, step, h, unroll=_FORI_UNROLL)

    hid_ref[...] = h


def init_params(key, hidden_size):
    """PyTorch nn.GRU(input=2H, hidden=H) layout, U(-1/sqrt(H), 1/sqrt(H)) init."""
    H = hidden_size
    I = 2 * H
    k = 1.0 / np.sqrt(H)
    k1, k2, k3, k4 = jax.random.split(key, 4)
    return {
        "w_ih": jax.random.uniform(k1, (3 * H, I), jnp.float32, -k, k),   # weight_ih_l0
        "w_hh": jax.random.uniform(k2, (3 * H, H), jnp.float32, -k, k),   # weight_hh_l0
        "b_ih": jax.random.uniform(k3, (3 * H,), jnp.float32, -k, k),
        "b_hh": jax.random.uniform(k4, (3 * H,), jnp.float32, -k, k),
    }


def pack_params(params, hidden_size, matmul_dtype=jnp.bfloat16):
    """Device layout:
       * per-gate lane padding H -> Hp (multiple of 128) so gate slices are full vregs,
       * weights transposed & cast to the MXU dtype (bf16 by default on all generations),
       * b_hr / b_hz folded into the input-projection bias (purely additive with gi);
         b_hn stays separate because PyTorch keeps it inside r*(W_hn h + b_hn).
    """
    H = hidden_size
    I = 2 * H
    Hp = _round_up(H, 128)
    # TODO(synk): if the production H stays small (e.g. 32), pack all three gates into a
    # single 128-lane slab and align r with gh_n via pltpu.roll instead of three Hp slabs.

    def pad_w(w, rows_to):
        w_t = jnp.transpose(w)                               # (rows, 3H)
        rows = w_t.shape[0]
        gates = [w_t[:, g * H:(g + 1) * H] for g in range(3)]
        gates = [jnp.pad(g, ((0, rows_to - rows), (0, Hp - H))) for g in gates]
        return jnp.concatenate(gates, axis=1).astype(matmul_dtype)

    def pad_gate(v):
        return jnp.pad(v, (0, Hp - H))

    b_ih, b_hh = params["b_ih"], params["b_hh"]
    b_r = pad_gate(b_ih[0:H] + b_hh[0:H])                    # fold b_hr
    b_z = pad_gate(b_ih[H:2 * H] + b_hh[H:2 * H])            # fold b_hz
    b_n = pad_gate(b_ih[2 * H:3 * H])
    b_hn = pad_gate(b_hh[2 * H:3 * H])

    return {
        "hidden_size": H,
        "w_ih_t": pad_w(params["w_ih"], I),                  # (I, 3*Hp)
        "w_hh_t": pad_w(params["w_hh"], Hp),                 # (Hp, 3*Hp)
        "b_gi": jnp.concatenate([b_r, b_z, b_n]).reshape(1, 3 * Hp).astype(jnp.float32),
        "b_hn": b_hn.reshape(1, Hp).astype(jnp.float32),
    }


def _vmem_limit_bytes(T, tB, I, Hp, mm_bytes):
    """Size-aware VMEM budget (BlockSpec double-buffers inputs/outputs)."""
    dbl = 2
    x_b = T * tB * I * mm_bytes * dbl
    out_b = T * tB * Hp * 4 * dbl
    hid_b = tB * Hp * 4 * dbl
    gi_b = T * tB * 3 * Hp * 4                               # single-buffered scratch
    w_b = (I + Hp) * 3 * Hp * mm_bytes * dbl
    misc = 4 * Hp * 4 * dbl + tB * 128 * 4 * dbl             # biases + padded lens
    budget = int(1.5 * (x_b + out_b + hid_b + gi_b + w_b + misc)) + (2 << 20)
    if budget <= (56 << 20):
        return max(budget, 32 << 20)                         # fits v5e/v6e/v7x (64 MiB)
    # TODO(synk): for very large Bp*T, time-chunk / bf16 the gi scratch so the footprint
    # fits v7x's 64 MiB VMEM; the larger request below is only valid on v5e/v6e (128 MiB).
    return min(budget, 120 << 20)


def context_encoder_forward(input_embeddings, input_lens, packed_params,
                            batch_tile=8):
    """
    input_embeddings: [B, T, 2H] float
    input_lens:       [B] host ints (descending, matching the packed call)
    returns ((outputs [B, max(lens), H], lens), hidden [B, H])
    """
    B, T, I = input_embeddings.shape
    H = packed_params["hidden_size"]
    Hp = packed_params["w_hh_t"].shape[0]
    mm_dtype = packed_params["w_ih_t"].dtype
    mm_bytes = jnp.dtype(mm_dtype).itemsize
    assert I == 2 * H

    # Batch tile: sublane-aligned for the matmul dtype (8 for f32, 16 for bf16) so the
    # in-kernel reshapes stay layout-free and blocked sublane dims are tile-aligned.
    sub = 8 if mm_bytes >= 4 else 16
    tB = _round_up(min(max(batch_tile, 1), max(B, 1)), sub)
    Bp = _round_up(max(B, 1), tB)
    n_tiles = Bp // tB

    # Time-major, batch-padded, MXU-dtype inputs: one XLA transpose outside the kernel.
    x_tm = jnp.transpose(input_embeddings, (1, 0, 2)).astype(mm_dtype)   # (T, B, I)
    x_p = jnp.zeros((T, Bp, I), mm_dtype).at[:, :B, :].set(x_tm)

    lens_np = np.asarray(input_lens, np.int32)
    lens_pad = np.zeros((Bp, 1), np.int32)
    lens_pad[:B, 0] = lens_np
    lens_p = jnp.asarray(lens_pad)

    vmem_limit = _vmem_limit_bytes(T, tB, I, Hp, mm_bytes)

    out_p, hid_p = pl.pallas_call(
        gru_kernel,
        out_shape=(jax.ShapeDtypeStruct((T, Bp, Hp), jnp.float32),
                   jax.ShapeDtypeStruct((Bp, Hp), jnp.float32)),
        grid_spec=pltpu.PrefetchScalarGridSpec(
            num_scalar_prefetch=0,
            grid=(n_tiles,),                                          # batch tiles
            in_specs=[
                pl.BlockSpec((T, tB, I), lambda b: (0, b, 0)),        # x (time-major)
                pl.BlockSpec((I, 3 * Hp), lambda b: (0, 0)),          # W_ih^T (resident)
                pl.BlockSpec((Hp, 3 * Hp), lambda b: (0, 0)),         # W_hh^T (resident)
                pl.BlockSpec((1, 3 * Hp), lambda b: (0, 0)),          # folded gi bias
                pl.BlockSpec((1, Hp), lambda b: (0, 0)),              # b_hn
                pl.BlockSpec((tB, 1), lambda b: (b, 0)),              # lens
            ],
            out_specs=(
                pl.BlockSpec((T, tB, Hp), lambda b: (0, b, 0)),       # outputs (time-major)
                pl.BlockSpec((tB, Hp), lambda b: (b, 0)),             # final hidden
            ),
            scratch_shapes=[pltpu.VMEM((T, tB, 3 * Hp), jnp.float32)],
        ),
        compiler_params=pltpu.CompilerParams(
            dimension_semantics=("parallel",),                        # shard batch tiles
            vmem_limit_bytes=vmem_limit,
        ),
    )(x_p, packed_params["w_ih_t"], packed_params["w_hh_t"],
      packed_params["b_gi"], packed_params["b_hn"], lens_p)

    max_len = int(lens_np.max())                             # pad_packed pads to max(lens)
    outputs = jnp.transpose(out_p[:max_len, :B, :H], (1, 0, 2))       # back to batch-first
    hidden = hid_p[:B, :H]
    # TODO(synk): enforce_sorted only affects packing order in PyTorch; masking makes it a no-op here.
    return (outputs, jnp.asarray(lens_np)), hidden


def reference_forward(x, lens, params):
    """Pure-JAX reference of the packed-GRU semantics (raw, unpadded weights)."""
    B, T, I = x.shape
    H = params["w_hh"].shape[1]
    w_ih_t, w_hh_t = params["w_ih"].T, params["w_hh"].T
    b_ih, b_hh = params["b_ih"][None], params["b_hh"][None]
    lens = jnp.asarray(np.asarray(lens), jnp.int32)
    h = jnp.zeros((B, H), jnp.float32)
    outs = []
    for t in range(T):
        gi = x[:, t, :] @ w_ih_t + b_ih
        gh = h @ w_hh_t + b_hh
        r = jax.nn.sigmoid(gi[:, :H] + gh[:, :H])
        z = jax.nn.sigmoid(gi[:, H:2 * H] + gh[:, H:2 * H])
        n = jnp.tanh(gi[:, 2 * H:] + r * gh[:, 2 * H:])
        h_new = (1.0 - z) * n + z * h
        valid = (t < lens)[:, None]
        outs.append(jnp.where(valid, h_new, 0.0))
        h = jnp.where(valid, h_new, h)
    return jnp.stack(outs, axis=1), h


if __name__ == "__main__":
    hidden_size = 32
    batch_size = 2
    max_time = 8

    key = jax.random.PRNGKey(0)
    k_params, k_x = jax.random.split(key)
    params = init_params(k_params, hidden_size)

    # input_embeddings: [batch, max_time, hidden*2]; lens descending (enforce_sorted analog)
    input_embeddings = jax.random.normal(
        k_x, (batch_size, max_time, hidden_size * 2), jnp.float32)
    input_lens = np.array([8, 5], dtype=np.int32)

    ref_out, ref_hid = reference_forward(input_embeddings, input_lens, params)
    max_len = int(np.max(input_lens))

    # --- strict correctness check: f32 matmul inputs, tight tolerance ---
    packed_f32 = pack_params(params, hidden_size, matmul_dtype=jnp.float32)
    (outputs, out_lens), hidden = context_encoder_forward(
        input_embeddings, input_lens, packed_f32)
    outputs = jax.block_until_ready(outputs)
    hidden = jax.block_until_ready(hidden)
    np.testing.assert_allclose(np.asarray(outputs),
                               np.asarray(ref_out[:, :max_len, :]),
                               rtol=1e-5, atol=1e-5)
    np.testing.assert_allclose(np.asarray(hidden), np.asarray(ref_hid),
                               rtol=1e-5, atol=1e-5)
    assert outputs.shape == (batch_size, max_len, hidden_size)
    assert hidden.shape == (batch_size, hidden_size)

    # --- default path: bf16 matmul inputs (MXU-native on v5e/v6e/v7x); gate math & h stay f32 ---
    packed_bf16 = pack_params(params, hidden_size)           # matmul_dtype=bf16 default
    (outputs_bf16, _), hidden_bf16 = context_encoder_forward(
        input_embeddings, input_lens, packed_bf16)
    outputs_bf16 = jax.block_until_ready(outputs_bf16)
    hidden_bf16 = jax.block_until_ready(hidden_bf16)
    np.testing.assert_allclose(np.asarray(outputs_bf16),
                               np.asarray(ref_out[:, :max_len, :]),
                               rtol=5e-2, atol=5e-2)
    np.testing.assert_allclose(np.asarray(hidden_bf16), np.asarray(ref_hid),
                               rtol=5e-2, atol=5e-2)

    print("KERNEL_OK")
</pallas_src>

<mosaic_0001>
module attributes {stable_mosaic.version = 11 : i64} {
  func.func @gru_kernel(%arg0: i32, %arg1: memref<8x8x64xf32, #tpu.memory_space<vmem>>, %arg2: memref<64x384xf32, #tpu.memory_space<vmem>>, %arg3: memref<128x384xf32, #tpu.memory_space<vmem>>, %arg4: memref<1x384xf32, #tpu.memory_space<vmem>>, %arg5: memref<1x128xf32, #tpu.memory_space<vmem>>, %arg6: memref<8x1xi32, #tpu.memory_space<vmem>>, %arg7: memref<8x8x128xf32, #tpu.memory_space<vmem>>, %arg8: memref<8x128xf32, #tpu.memory_space<vmem>>, %arg9: memref<8x8x384xf32, #tpu.memory_space<vmem>>) attributes {dimension_semantics = [#tpu.dimension_semantics<parallel>], iteration_bounds = array<i64: 1>, scalar_prefetch = 0 : i64, scratch_operands = 1 : i64, tpu.core_type = #tpu.core_type<tc>, window_params = [{transform_indices = @transform_0, window_bounds = array<i64: 8, 8, 64>}, {pipeline_mode = #tpu.pipeline_mode<synchronous>, transform_indices = @transform_1, window_bounds = array<i64: 64, 384>}, {pipeline_mode = #tpu.pipeline_mode<synchronous>, transform_indices = @transform_2, window_bounds = array<i64: 128, 384>}, {pipeline_mode = #tpu.pipeline_mode<synchronous>, transform_indices = @transform_3, window_bounds = array<i64: 1, 384>}, {pipeline_mode = #tpu.pipeline_mode<synchronous>, transform_indices = @transform_4, window_bounds = array<i64: 1, 128>}, {transform_indices = @transform_5, window_bounds = array<i64: 8, 1>}, {transform_indices = @transform_6, window_bounds = array<i64: 8, 8, 128>}, {transform_indices = @transform_7, window_bounds = array<i64: 8, 128>}]} {
    %c0 = arith.constant 0 : index
    %c0_0 = arith.constant 0 : index
    %0 = vector.load %arg2[%c0, %c0_0] : memref<64x384xf32, #tpu.memory_space<vmem>>, vector<64x384xf32>
    %c0_1 = arith.constant 0 : index
    %c0_2 = arith.constant 0 : index
    %1 = vector.load %arg3[%c0_1, %c0_2] : memref<128x384xf32, #tpu.memory_space<vmem>>, vector<128x384xf32>
    %c0_3 = arith.constant 0 : index
    %c0_4 = arith.constant 0 : index
    %2 = vector.load %arg4[%c0_3, %c0_4] : memref<1x384xf32, #tpu.memory_space<vmem>>, vector<1x384xf32>
    %c0_5 = arith.constant 0 : index
    %c0_6 = arith.constant 0 : index
    %3 = vector.load %arg5[%c0_5, %c0_6] : memref<1x128xf32, #tpu.memory_space<vmem>>, vector<1x128xf32>
    %c0_7 = arith.constant 0 : index
    %c0_8 = arith.constant 0 : index
    %4 = vector.load %arg6[%c0_7, %c0_8] : memref<8x1xi32, #tpu.memory_space<vmem>>, vector<8x1xi32>
    %c0_9 = arith.constant 0 : index
    %c0_10 = arith.constant 0 : index
    %c0_11 = arith.constant 0 : index
    %5 = vector.load %arg1[%c0_9, %c0_10, %c0_11] : memref<8x8x64xf32, #tpu.memory_space<vmem>>, vector<8x8x64xf32>
    %6 = vector.shape_cast %5 : vector<8x8x64xf32> to vector<64x64xf32>
    %cst = arith.constant dense<0.000000e+00> : vector<64x384xf32>
    %7 = tpu.matmul %6, %0, %cst {dimension_numbers = #tpu.dot_dimension_numbers<[1], [0], [0], [1], [0, 0, 1, 1], [], []>} : vector<64x64xf32>, vector<64x384xf32>, vector<64x384xf32> -> vector<64x384xf32>
    %8 = vector.broadcast %2 : vector<1x384xf32> to vector<64x384xf32>
    %9 = arith.addf %7, %8 : vector<64x384xf32>
    %10 = vector.shape_cast %9 : vector<64x384xf32> to vector<8x8x384xf32>
    %c0_12 = arith.constant 0 : index
    %c0_13 = arith.constant 0 : index
    %c0_14 = arith.constant 0 : index
    %11 = vector.load %arg9[%c0_12, %c0_13, %c0_14] : memref<8x8x384xf32, #tpu.memory_space<vmem>>, vector<8x8x384xf32>
    tpu.vector_store %arg9[%c0_12, %c0_13, %c0_14], %10 {strides = array<i32>} : memref<8x8x384xf32, #tpu.memory_space<vmem>>, vector<8x8x384xf32>,
    %cst_15 = arith.constant 0.000000e+00 : f32
    %12 = vector.broadcast %cst_15 : f32 to vector<8x128xf32>
    %c0_16 = arith.constant 0 : index
    %c0_17 = arith.constant 0 : index
    %c0_18 = arith.constant 0 : index
    %13 = vector.load %arg9[%c0_16, %c0_17, %c0_18] : memref<8x8x384xf32, #tpu.memory_space<vmem>>, vector<1x8x384xf32>
    %14 = vector.shape_cast %13 : vector<1x8x384xf32> to vector<8x384xf32>
    %cst_19 = arith.constant dense<0.000000e+00> : vector<8x384xf32>
    %15 = tpu.matmul %12, %1, %cst_19 {dimension_numbers = #tpu.dot_dimension_numbers<[1], [0], [0], [1], [0, 0, 1, 1], [], []>} : vector<8x128xf32>, vector<128x384xf32>, vector<8x384xf32> -> vector<8x384xf32>
    %16 = vector.extract_strided_slice %14 {offsets = [0, 0], sizes = [8, 128], strides = [1, 1]} : vector<8x384xf32> to vector<8x128xf32>
    %17 = vector.extract_strided_slice %15 {offsets = [0, 0], sizes = [8, 128], strides = [1, 1]} : vector<8x384xf32> to vector<8x128xf32>
    %18 = arith.addf %16, %17 : vector<8x128xf32>
    %cst_20 = arith.constant 5.000000e-01 : f32
    %19 = vector.broadcast %cst_20 : f32 to vector<8x128xf32>
    %20 = arith.mulf %19, %18 : vector<8x128xf32>
    %21 = math.tanh %20 : vector<8x128xf32>
    %cst_21 = arith.constant 1.000000e+00 : f32
    %22 = vector.broadcast %cst_21 : f32 to vector<8x128xf32>
    %23 = arith.addf %21, %22 : vector<8x128xf32>
    %cst_22 = arith.constant 5.000000e-01 : f32
    %24 = vector.broadcast %cst_22 : f32 to vector<8x128xf32>
    %25 = arith.mulf %24, %23 : vector<8x128xf32>
    %26 = vector.extract_strided_slice %14 {offsets = [0, 128], sizes = [8, 128], strides = [1, 1]} : vector<8x384xf32> to vector<8x128xf32>
    %27 = vector.extract_strided_slice %15 {offsets = [0, 128], sizes = [8, 128], strides = [1, 1]} : vector<8x384xf32> to vector<8x128xf32>
    %28 = arith.addf %26, %27 : vector<8x128xf32>
    %cst_23 = arith.constant 5.000000e-01 : f32
    %29 = vector.broadcast %cst_23 : f32 to vector<8x128xf32>
    %30 = arith.mulf %29, %28 : vector<8x128xf32>
    %31 = math.tanh %30 : vector<8x128xf32>
    %cst_24 = arith.constant 1.000000e+00 : f32
    %32 = vector.broadcast %cst_24 : f32 to vector<8x128xf32>
    %33 = arith.addf %31, %32 : vector<8x128xf32>
    %cst_25 = arith.constant 5.000000e-01 : f32
    %34 = vector.broadcast %cst_25 : f32 to vector<8x128xf32>
    %35 = arith.mulf %34, %33 : vector<8x128xf32>
    %36 = vector.extract_strided_slice %14 {offsets = [0, 256], sizes = [8, 128], strides = [1, 1]} : vector<8x384xf32> to vector<8x128xf32>
    %37 = vector.extract_strided_slice %15 {offsets = [0, 256], sizes = [8, 128], strides = [1, 1]} : vector<8x384xf32> to vector<8x128xf32>
    %38 = vector.broadcast %3 : vector<1x128xf32> to vector<8x128xf32>
    %39 = arith.addf %37, %38 : vector<8x128xf32>
    %40 = arith.mulf %25, %39 : vector<8x128xf32>
    %41 = arith.addf %36, %40 : vector<8x128xf32>
    %42 = math.tanh %41 : vector<8x128xf32>
    %cst_26 = arith.constant 1.000000e+00 : f32
    %43 = vector.broadcast %cst_26 : f32 to vector<8x128xf32>
    %44 = arith.subf %43, %35 : vector<8x128xf32>
    %45 = arith.mulf %44, %42 : vector<8x128xf32>
    %46 = arith.mulf %35, %12 : vector<8x128xf32>
    %47 = arith.addf %45, %46 : vector<8x128xf32>
    %c0_i32 = arith.constant 0 : i32
    %48 = vector.broadcast %c0_i32 : i32 to vector<8x1xi32>
    %49 = arith.cmpi sgt, %4, %48 : vector<8x1xi32>
    %cst_27 = arith.constant 0.000000e+00 : f32
    %50 = vector.shape_cast %49 : vector<8x1xi1> to vector<8x1xi1>
    %51 = vector.broadcast %50 : vector<8x1xi1> to vector<8x128xi1>
    %52 = vector.broadcast %cst_27 : f32 to vector<8x128xf32>
    %53 = arith.select %51, %47, %52 : vector<8x128xi1>, vector<8x128xf32>
    %c0_28 = arith.constant 0 : index
    %c0_29 = arith.constant 0 : index
    %c0_30 = arith.constant 0 : index
    %54 = vector.load %arg7[%c0_28, %c0_29, %c0_30] : memref<8x8x128xf32, #tpu.memory_space<vmem>>, vector<1x8x128xf32>
    %55 = vector.shape_cast %54 : vector<1x8x128xf32> to vector<8x128xf32>
    %56 = vector.shape_cast %53 : vector<8x128xf32> to vector<1x8x128xf32>
    tpu.vector_store %arg7[%c0_28, %c0_29, %c0_30], %56 {strides = array<i32>} : memref<8x8x128xf32, #tpu.memory_space<vmem>>, vector<1x8x128xf32>,
    %57 = vector.shape_cast %49 : vector<8x1xi1> to vector<8x1xi1>
    %58 = vector.broadcast %57 : vector<8x1xi1> to vector<8x128xi1>
    %59 = arith.select %58, %47, %12 : vector<8x128xi1>, vector<8x128xf32>
    %c1 = arith.constant 1 : index
    %c0_31 = arith.constant 0 : index
    %c0_32 = arith.constant 0 : index
    %60 = vector.load %arg9[%c1, %c0_31, %c0_32] : memref<8x8x384xf32, #tpu.memory_space<vmem>>, vector<1x8x384xf32>
    %61 = vector.shape_cast %60 : vector<1x8x384xf32> to vector<8x384xf32>
    %cst_33 = arith.constant dense<0.000000e+00> : vector<8x384xf32>
    %62 = tpu.matmul %59, %1, %cst_33 {dimension_numbers = #tpu.dot_dimension_numbers<[1], [0], [0], [1], [0, 0, 1, 1], [], []>} : vector<8x128xf32>, vector<128x384xf32>, vector<8x384xf32> -> vector<8x384xf32>
    %63 = vector.extract_strided_slice %61 {offsets = [0, 0], sizes = [8, 128], strides = [1, 1]} : vector<8x384xf32> to vector<8x128xf32>
    %64 = vector.extract_strided_slice %62 {offsets = [0, 0], sizes = [8, 128], strides = [1, 1]} : vector<8x384xf32> to vector<8x128xf32>
    %65 = arith.addf %63, %64 : vector<8x128xf32>
    %cst_34 = arith.constant 5.000000e-01 : f32
    %66 = vector.broadcast %cst_34 : f32 to vector<8x128xf32>
    %67 = arith.mulf %66, %65 : vector<8x128xf32>
    %68 = math.tanh %67 : vector<8x128xf32>
    %cst_35 = arith.constant 1.000000e+00 : f32
    %69 = vector.broadcast %cst_35 : f32 to vector<8x128xf32>
    %70 = arith.addf %68, %69 : vector<8x128xf32>
    %cst_36 = arith.constant 5.000000e-01 : f32
    %71 = vector.broadcast %cst_36 : f32 to vector<8x128xf32>
    %72 = arith.mulf %71, %70 : vector<8x128xf32>
    %73 = vector.extract_strided_slice %61 {offsets = [0, 128], sizes = [8, 128], strides = [1, 1]} : vector<8x384xf32> to vector<8x128xf32>
    %74 = vector.extract_strided_slice %62 {offsets = [0, 128], sizes = [8, 128], strides = [1, 1]} : vector<8x384xf32> to vector<8x128xf32>
    %75 = arith.addf %73, %74 : vector<8x128xf32>
    %cst_37 = arith.constant 5.000000e-01 : f32
    %76 = vector.broadcast %cst_37 : f32 to vector<8x128xf32>
    %77 = arith.mulf %76, %75 : vector<8x128xf32>
    %78 = math.tanh %77 : vector<8x128xf32>
    %cst_38 = arith.constant 1.000000e+00 : f32
    %79 = vector.broadcast %cst_38 : f32 to vector<8x128xf32>
    %80 = arith.addf %78, %79 : vector<8x128xf32>
    %cst_39 = arith.constant 5.000000e-01 : f32
    %81 = vector.broadcast %cst_39 : f32 to vector<8x128xf32>
    %82 = arith.mulf %81, %80 : vector<8x128xf32>
    %83 = vector.extract_strided_slice %61 {offsets = [0, 256], sizes = [8, 128], strides = [1, 1]} : vector<8x384xf32> to vector<8x128xf32>
    %84 = vector.extract_strided_slice %62 {offsets = [0, 256], sizes = [8, 128], strides = [1, 1]} : vector<8x384xf32> to vector<8x128xf32>
    %85 = vector.broadcast %3 : vector<1x128xf32> to vector<8x128xf32>
    %86 = arith.addf %84, %85 : vector<8x128xf32>
    %87 = arith.mulf %72, %86 : vector<8x128xf32>
    %88 = arith.addf %83, %87 : vector<8x128xf32>
    %89 = math.tanh %88 : vector<8x128xf32>
    %cst_40 = arith.constant 1.000000e+00 : f32
    %90 = vector.broadcast %cst_40 : f32 to vector<8x128xf32>
    %91 = arith.subf %90, %82 : vector<8x128xf32>
    %92 = arith.mulf %91, %89 : vector<8x128xf32>
    %93 = arith.mulf %82, %59 : vector<8x128xf32>
    %94 = arith.addf %92, %93 : vector<8x128xf32>
    %c1_i32 = arith.constant 1 : i32
    %95 = vector.broadcast %c1_i32 : i32 to vector<8x1xi32>
    %96 = arith.cmpi sgt, %4, %95 : vector<8x1xi32>
    %cst_41 = arith.constant 0.000000e+00 : f32
    %97 = vector.shape_cast %96 : vector<8x1xi1> to vector<8x1xi1>
    %98 = vector.broadcast %97 : vector<8x1xi1> to vector<8x128xi1>
    %99 = vector.broadcast %cst_41 : f32 to vector<8x128xf32>
    %100 = arith.select %98, %94, %99 : vector<8x128xi1>, vector<8x128xf32>
    %c1_42 = arith.constant 1 : index
    %c0_43 = arith.constant 0 : index
    %c0_44 = arith.constant 0 : index
    %101 = vector.load %arg7[%c1_42, %c0_43, %c0_44] : memref<8x8x128xf32, #tpu.memory_space<vmem>>, vector<1x8x128xf32>
    %102 = vector.shape_cast %101 : vector<1x8x128xf32> to vector<8x128xf32>
    %103 = vector.shape_cast %100 : vector<8x128xf32> to vector<1x8x128xf32>
    tpu.vector_store %arg7[%c1_42, %c0_43, %c0_44], %103 {strides = array<i32>} : memref<8x8x128xf32, #tpu.memory_space<vmem>>, vector<1x8x128xf32>,
    %104 = vector.shape_cast %96 : vector<8x1xi1> to vector<8x1xi1>
    %105 = vector.broadcast %104 : vector<8x1xi1> to vector<8x128xi1>
    %106 = arith.select %105, %94, %59 : vector<8x128xi1>, vector<8x128xf32>
    %c2 = arith.constant 2 : index
    %c0_45 = arith.constant 0 : index
    %c0_46 = arith.constant 0 : index
    %107 = vector.load %arg9[%c2, %c0_45, %c0_46] : memref<8x8x384xf32, #tpu.memory_space<vmem>>, vector<1x8x384xf32>
    %108 = vector.shape_cast %107 : vector<1x8x384xf32> to vector<8x384xf32>
    %cst_47 = arith.constant dense<0.000000e+00> : vector<8x384xf32>
    %109 = tpu.matmul %106, %1, %cst_47 {dimension_numbers = #tpu.dot_dimension_numbers<[1], [0], [0], [1], [0, 0, 1, 1], [], []>} : vector<8x128xf32>, vector<128x384xf32>, vector<8x384xf32> -> vector<8x384xf32>
    %110 = vector.extract_strided_slice %108 {offsets = [0, 0], sizes = [8, 128], strides = [1, 1]} : vector<8x384xf32> to vector<8x128xf32>
    %111 = vector.extract_strided_slice %109 {offsets = [0, 0], sizes = [8, 128], strides = [1, 1]} : vector<8x384xf32> to vector<8x128xf32>
    %112 = arith.addf %110, %111 : vector<8x128xf32>
    %cst_48 = arith.constant 5.000000e-01 : f32
    %113 = vector.broadcast %cst_48 : f32 to vector<8x128xf32>
    %114 = arith.mulf %113, %112 : vector<8x128xf32>
    %115 = math.tanh %114 : vector<8x128xf32>
    %cst_49 = arith.constant 1.000000e+00 : f32
    %116 = vector.broadcast %cst_49 : f32 to vector<8x128xf32>
    %117 = arith.addf %115, %116 : vector<8x128xf32>
    %cst_50 = arith.constant 5.000000e-01 : f32
    %118 = vector.broadcast %cst_50 : f32 to vector<8x128xf32>
    %119 = arith.mulf %118, %117 : vector<8x128xf32>
    %120 = vector.extract_strided_slice %108 {offsets = [0, 128], sizes = [8, 128], strides = [1, 1]} : vector<8x384xf32> to vector<8x128xf32>
    %121 = vector.extract_strided_slice %109 {offsets = [0, 128], sizes = [8, 128], strides = [1, 1]} : vector<8x384xf32> to vector<8x128xf32>
    %122 = arith.addf %120, %121 : vector<8x128xf32>
    %cst_51 = arith.constant 5.000000e-01 : f32
    %123 = vector.broadcast %cst_51 : f32 to vector<8x128xf32>
    %124 = arith.mulf %123, %122 : vector<8x128xf32>
    %125 = math.tanh %124 : vector<8x128xf32>
    %cst_52 = arith.constant 1.000000e+00 : f32
    %126 = vector.broadcast %cst_52 : f32 to vector<8x128xf32>
    %127 = arith.addf %125, %126 : vector<8x128xf32>
    %cst_53 = arith.constant 5.000000e-01 : f32
    %128 = vector.broadcast %cst_53 : f32 to vector<8x128xf32>
    %129 = arith.mulf %128, %127 : vector<8x128xf32>
    %130 = vector.extract_strided_slice %108 {offsets = [0, 256], sizes = [8, 128], strides = [1, 1]} : vector<8x384xf32> to vector<8x128xf32>
    %131 = vector.extract_strided_slice %109 {offsets = [0, 256], sizes = [8, 128], strides = [1, 1]} : vector<8x384xf32> to vector<8x128xf32>
    %132 = vector.broadcast %3 : vector<1x128xf32> to vector<8x128xf32>
    %133 = arith.addf %131, %132 : vector<8x128xf32>
    %134 = arith.mulf %119, %133 : vector<8x128xf32>
    %135 = arith.addf %130, %134 : vector<8x128xf32>
    %136 = math.tanh %135 : vector<8x128xf32>
    %cst_54 = arith.constant 1.000000e+00 : f32
    %137 = vector.broadcast %cst_54 : f32 to vector<8x128xf32>
    %138 = arith.subf %137, %129 : vector<8x128xf32>
    %139 = arith.mulf %138, %136 : vector<8x128xf32>
    %140 = arith.mulf %129, %106 : vector<8x128xf32>
    %141 = arith.addf %139, %140 : vector<8x128xf32>
    %c2_i32 = arith.constant 2 : i32
    %142 = vector.broadcast %c2_i32 : i32 to vector<8x1xi32>
    %143 = arith.cmpi sgt, %4, %142 : vector<8x1xi32>
    %cst_55 = arith.constant 0.000000e+00 : f32
    %144 = vector.shape_cast %143 : vector<8x1xi1> to vector<8x1xi1>
    %145 = vector.broadcast %144 : vector<8x1xi1> to vector<8x128xi1>
    %146 = vector.broadcast %cst_55 : f32 to vector<8x128xf32>
    %147 = arith.select %145, %141, %146 : vector<8x128xi1>, vector<8x128xf32>
    %c2_56 = arith.constant 2 : index
    %c0_57 = arith.constant 0 : index
    %c0_58 = arith.constant 0 : index
    %148 = vector.load %arg7[%c2_56, %c0_57, %c0_58] : memref<8x8x128xf32, #tpu.memory_space<vmem>>, vector<1x8x128xf32>
    %149 = vector.shape_cast %148 : vector<1x8x128xf32> to vector<8x128xf32>
    %150 = vector.shape_cast %147 : vector<8x128xf32> to vector<1x8x128xf32>
    tpu.vector_store %arg7[%c2_56, %c0_57, %c0_58], %150 {strides = array<i32>} : memref<8x8x128xf32, #tpu.memory_space<vmem>>, vector<1x8x128xf32>,
    %151 = vector.shape_cast %143 : vector<8x1xi1> to vector<8x1xi1>
    %152 = vector.broadcast %151 : vector<8x1xi1> to vector<8x128xi1>
    %153 = arith.select %152, %141, %106 : vector<8x128xi1>, vector<8x128xf32>
    %c3 = arith.constant 3 : index
    %c0_59 = arith.constant 0 : index
    %c0_60 = arith.constant 0 : index
    %154 = vector.load %arg9[%c3, %c0_59, %c0_60] : memref<8x8x384xf32, #tpu.memory_space<vmem>>, vector<1x8x384xf32>
    %155 = vector.shape_cast %154 : vector<1x8x384xf32> to vector<8x384xf32>
    %cst_61 = arith.constant dense<0.000000e+00> : vector<8x384xf32>
    %156 = tpu.matmul %153, %1, %cst_61 {dimension_numbers = #tpu.dot_dimension_numbers<[1], [0], [0], [1], [0, 0, 1, 1], [], []>} : vector<8x128xf32>, vector<128x384xf32>, vector<8x384xf32> -> vector<8x384xf32>
    %157 = vector.extract_strided_slice %155 {offsets = [0, 0], sizes = [8, 128], strides = [1, 1]} : vector<8x384xf32> to vector<8x128xf32>
    %158 = vector.extract_strided_slice %156 {offsets = [0, 0], sizes = [8, 128], strides = [1, 1]} : vector<8x384xf32> to vector<8x128xf32>
    %159 = arith.addf %157, %158 : vector<8x128xf32>
    %cst_62 = arith.constant 5.000000e-01 : f32
    %160 = vector.broadcast %cst_62 : f32 to vector<8x128xf32>
    %161 = arith.mulf %160, %159 : vector<8x128xf32>
    %162 = math.tanh %161 : vector<8x128xf32>
    %cst_63 = arith.constant 1.000000e+00 : f32
    %163 = vector.broadcast %cst_63 : f32 to vector<8x128xf32>
    %164 = arith.addf %162, %163 : vector<8x128xf32>
    %cst_64 = arith.constant 5.000000e-01 : f32
    %165 = vector.broadcast %cst_64 : f32 to vector<8x128xf32>
    %166 = arith.mulf %165, %164 : vector<8x128xf32>
    %167 = vector.extract_strided_slice %155 {offsets = [0, 128], sizes = [8, 128], strides = [1, 1]} : vector<8x384xf32> to vector<8x128xf32>
    %168 = vector.extract_strided_slice %156 {offsets = [0, 128], sizes = [8, 128], strides = [1, 1]} : vector<8x384xf32> to vector<8x128xf32>
    %169 = arith.addf %167, %168 : vector<8x128xf32>
    %cst_65 = arith.constant 5.000000e-01 : f32
    %170 = vector.broadcast %cst_65 : f32 to vector<8x128xf32>
    %171 = arith.mulf %170, %169 : vector<8x128xf32>
    %172 = math.tanh %171 : vector<8x128xf32>
    %cst_66 = arith.constant 1.000000e+00 : f32
    %173 = vector.broadcast %cst_66 : f32 to vector<8x128xf32>
    %174 = arith.addf %172, %173 : vector<8x128xf32>
    %cst_67 = arith.constant 5.000000e-01 : f32
    %175 = vector.broadcast %cst_67 : f32 to vector<8x128xf32>
    %176 = arith.mulf %175, %174 : vector<8x128xf32>
    %177 = vector.extract_strided_slice %155 {offsets = [0, 256], sizes = [8, 128], strides = [1, 1]} : vector<8x384xf32> to vector<8x128xf32>
    %178 = vector.extract_strided_slice %156 {offsets = [0, 256], sizes = [8, 128], strides = [1, 1]} : vector<8x384xf32> to vector<8x128xf32>
    %179 = vector.broadcast %3 : vector<1x128xf32> to vector<8x128xf32>
    %180 = arith.addf %178, %179 : vector<8x128xf32>
    %181 = arith.mulf %166, %180 : vector<8x128xf32>
    %182 = arith.addf %177, %181 : vector<8x128xf32>
    %183 = math.tanh %182 : vector<8x128xf32>
    %cst_68 = arith.constant 1.000000e+00 : f32
    %184 = vector.broadcast %cst_68 : f32 to vector<8x128xf32>
    %185 = arith.subf %184, %176 : vector<8x128xf32>
    %186 = arith.mulf %185, %183 : vector<8x128xf32>
    %187 = arith.mulf %176, %153 : vector<8x128xf32>
    %188 = arith.addf %186, %187 : vector<8x128xf32>
    %c3_i32 = arith.constant 3 : i32
    %189 = vector.broadcast %c3_i32 : i32 to vector<8x1xi32>
    %190 = arith.cmpi sgt, %4, %189 : vector<8x1xi32>
    %cst_69 = arith.constant 0.000000e+00 : f32
    %191 = vector.shape_cast %190 : vector<8x1xi1> to vector<8x1xi1>
    %192 = vector.broadcast %191 : vector<8x1xi1> to vector<8x128xi1>
    %193 = vector.broadcast %cst_69 : f32 to vector<8x128xf32>
    %194 = arith.select %192, %188, %193 : vector<8x128xi1>, vector<8x128xf32>
    %c3_70 = arith.constant 3 : index
    %c0_71 = arith.constant 0 : index
    %c0_72 = arith.constant 0 : index
    %195 = vector.load %arg7[%c3_70, %c0_71, %c0_72] : memref<8x8x128xf32, #tpu.memory_space<vmem>>, vector<1x8x128xf32>
    %196 = vector.shape_cast %195 : vector<1x8x128xf32> to vector<8x128xf32>
    %197 = vector.shape_cast %194 : vector<8x128xf32> to vector<1x8x128xf32>
    tpu.vector_store %arg7[%c3_70, %c0_71, %c0_72], %197 {strides = array<i32>} : memref<8x8x128xf32, #tpu.memory_space<vmem>>, vector<1x8x128xf32>,
    %198 = vector.shape_cast %190 : vector<8x1xi1> to vector<8x1xi1>
    %199 = vector.broadcast %198 : vector<8x1xi1> to vector<8x128xi1>
    %200 = arith.select %199, %188, %153 : vector<8x128xi1>, vector<8x128xf32>
    %c4 = arith.constant 4 : index
    %c0_73 = arith.constant 0 : index
    %c0_74 = arith.constant 0 : index
    %201 = vector.load %arg9[%c4, %c0_73, %c0_74] : memref<8x8x384xf32, #tpu.memory_space<vmem>>, vector<1x8x384xf32>
    %202 = vector.shape_cast %201 : vector<1x8x384xf32> to vector<8x384xf32>
    %cst_75 = arith.constant dense<0.000000e+00> : vector<8x384xf32>
    %203 = tpu.matmul %200, %1, %cst_75 {dimension_numbers = #tpu.dot_dimension_numbers<[1], [0], [0], [1], [0, 0, 1, 1], [], []>} : vector<8x128xf32>, vector<128x384xf32>, vector<8x384xf32> -> vector<8x384xf32>
    %204 = vector.extract_strided_slice %202 {offsets = [0, 0], sizes = [8, 128], strides = [1, 1]} : vector<8x384xf32> to vector<8x128xf32>
    %205 = vector.extract_strided_slice %203 {offsets = [0, 0], sizes = [8, 128], strides = [1, 1]} : vector<8x384xf32> to vector<8x128xf32>
    %206 = arith.addf %204, %205 : vector<8x128xf32>
    %cst_76 = arith.constant 5.000000e-01 : f32
    %207 = vector.broadcast %cst_76 : f32 to vector<8x128xf32>
    %208 = arith.mulf %207, %206 : vector<8x128xf32>
    %209 = math.tanh %208 : vector<8x128xf32>
    %cst_77 = arith.constant 1.000000e+00 : f32
    %210 = vector.broadcast %cst_77 : f32 to vector<8x128xf32>
    %211 = arith.addf %209, %210 : vector<8x128xf32>
    %cst_78 = arith.constant 5.000000e-01 : f32
    %212 = vector.broadcast %cst_78 : f32 to vector<8x128xf32>
    %213 = arith.mulf %212, %211 : vector<8x128xf32>
    %214 = vector.extract_strided_slice %202 {offsets = [0, 128], sizes = [8, 128], strides = [1, 1]} : vector<8x384xf32> to vector<8x128xf32>
    %215 = vector.extract_strided_slice %203 {offsets = [0, 128], sizes = [8, 128], strides = [1, 1]} : vector<8x384xf32> to vector<8x128xf32>
    %216 = arith.addf %214, %215 : vector<8x128xf32>
    %cst_79 = arith.constant 5.000000e-01 : f32
    %217 = vector.broadcast %cst_79 : f32 to vector<8x128xf32>
    %218 = arith.mulf %217, %216 : vector<8x128xf32>
    %219 = math.tanh %218 : vector<8x128xf32>
    %cst_80 = arith.constant 1.000000e+00 : f32
    %220 = vector.broadcast %cst_80 : f32 to vector<8x128xf32>
    %221 = arith.addf %219, %220 : vector<8x128xf32>
    %cst_81 = arith.constant 5.000000e-01 : f32
    %222 = vector.broadcast %cst_81 : f32 to vector<8x128xf32>
    %223 = arith.mulf %222, %221 : vector<8x128xf32>
    %224 = vector.extract_strided_slice %202 {offsets = [0, 256], sizes = [8, 128], strides = [1, 1]} : vector<8x384xf32> to vector<8x128xf32>
    %225 = vector.extract_strided_slice %203 {offsets = [0, 256], sizes = [8, 128], strides = [1, 1]} : vector<8x384xf32> to vector<8x128xf32>
    %226 = vector.broadcast %3 : vector<1x128xf32> to vector<8x128xf32>
    %227 = arith.addf %225, %226 : vector<8x128xf32>
    %228 = arith.mulf %213, %227 : vector<8x128xf32>
    %229 = arith.addf %224, %228 : vector<8x128xf32>
    %230 = math.tanh %229 : vector<8x128xf32>
    %cst_82 = arith.constant 1.000000e+00 : f32
    %231 = vector.broadcast %cst_82 : f32 to vector<8x128xf32>
    %232 = arith.subf %231, %223 : vector<8x128xf32>
    %233 = arith.mulf %232, %230 : vector<8x128xf32>
    %234 = arith.mulf %223, %200 : vector<8x128xf32>
    %235 = arith.addf %233, %234 : vector<8x128xf32>
    %c4_i32 = arith.constant 4 : i32
    %236 = vector.broadcast %c4_i32 : i32 to vector<8x1xi32>
    %237 = arith.cmpi sgt, %4, %236 : vector<8x1xi32>
    %cst_83 = arith.constant 0.000000e+00 : f32
    %238 = vector.shape_cast %237 : vector<8x1xi1> to vector<8x1xi1>
    %239 = vector.broadcast %238 : vector<8x1xi1> to vector<8x128xi1>
    %240 = vector.broadcast %cst_83 : f32 to vector<8x128xf32>
    %241 = arith.select %239, %235, %240 : vector<8x128xi1>, vector<8x128xf32>
    %c4_84 = arith.constant 4 : index
    %c0_85 = arith.constant 0 : index
    %c0_86 = arith.constant 0 : index
    %242 = vector.load %arg7[%c4_84, %c0_85, %c0_86] : memref<8x8x128xf32, #tpu.memory_space<vmem>>, vector<1x8x128xf32>
    %243 = vector.shape_cast %242 : vector<1x8x128xf32> to vector<8x128xf32>
    %244 = vector.shape_cast %241 : vector<8x128xf32> to vector<1x8x128xf32>
    tpu.vector_store %arg7[%c4_84, %c0_85, %c0_86], %244 {strides = array<i32>} : memref<8x8x128xf32, #tpu.memory_space<vmem>>, vector<1x8x128xf32>,
    %245 = vector.shape_cast %237 : vector<8x1xi1> to vector<8x1xi1>
    %246 = vector.broadcast %245 : vector<8x1xi1> to vector<8x128xi1>
    %247 = arith.select %246, %235, %200 : vector<8x128xi1>, vector<8x128xf32>
    %c5 = arith.constant 5 : index
    %c0_87 = arith.constant 0 : index
    %c0_88 = arith.constant 0 : index
    %248 = vector.load %arg9[%c5, %c0_87, %c0_88] : memref<8x8x384xf32, #tpu.memory_space<vmem>>, vector<1x8x384xf32>
    %249 = vector.shape_cast %248 : vector<1x8x384xf32> to vector<8x384xf32>
    %cst_89 = arith.constant dense<0.000000e+00> : vector<8x384xf32>
    %250 = tpu.matmul %247, %1, %cst_89 {dimension_numbers = #tpu.dot_dimension_numbers<[1], [0], [0], [1], [0, 0, 1, 1], [], []>} : vector<8x128xf32>, vector<128x384xf32>, vector<8x384xf32> -> vector<8x384xf32>
    %251 = vector.extract_strided_slice %249 {offsets = [0, 0], sizes = [8, 128], strides = [1, 1]} : vector<8x384xf32> to vector<8x128xf32>
    %252 = vector.extract_strided_slice %250 {offsets = [0, 0], sizes = [8, 128], strides = [1, 1]} : vector<8x384xf32> to vector<8x128xf32>
    %253 = arith.addf %251, %252 : vector<8x128xf32>
    %cst_90 = arith.constant 5.000000e-01 : f32
    %254 = vector.broadcast %cst_90 : f32 to vector<8x128xf32>
    %255 = arith.mulf %254, %253 : vector<8x128xf32>
    %256 = math.tanh %255 : vector<8x128xf32>
    %cst_91 = arith.constant 1.000000e+00 : f32
    %257 = vector.broadcast %cst_91 : f32 to vector<8x128xf32>
    %258 = arith.addf %256, %257 : vector<8x128xf32>
    %cst_92 = arith.constant 5.000000e-01 : f32
    %259 = vector.broadcast %cst_92 : f32 to vector<8x128xf32>
    %260 = arith.mulf %259, %258 : vector<8x128xf32>
    %261 = vector.extract_strided_slice %249 {offsets = [0, 128], sizes = [8, 128], strides = [1, 1]} : vector<8x384xf32> to vector<8x128xf32>
    %262 = vector.extract_strided_slice %250 {offsets = [0, 128], sizes = [8, 128], strides = [1, 1]} : vector<8x384xf32> to vector<8x128xf32>
    %263 = arith.addf %261, %262 : vector<8x128xf32>
    %cst_93 = arith.constant 5.000000e-01 : f32
    %264 = vector.broadcast %cst_93 : f32 to vector<8x128xf32>
    %265 = arith.mulf %264, %263 : vector<8x128xf32>
    %266 = math.tanh %265 : vector<8x128xf32>
    %cst_94 = arith.constant 1.000000e+00 : f32
    %267 = vector.broadcast %cst_94 : f32 to vector<8x128xf32>
    %268 = arith.addf %266, %267 : vector<8x128xf32>
    %cst_95 = arith.constant 5.000000e-01 : f32
    %269 = vector.broadcast %cst_95 : f32 to vector<8x128xf32>
    %270 = arith.mulf %269, %268 : vector<8x128xf32>
    %271 = vector.extract_strided_slice %249 {offsets = [0, 256], sizes = [8, 128], strides = [1, 1]} : vector<8x384xf32> to vector<8x128xf32>
    %272 = vector.extract_strided_slice %250 {offsets = [0, 256], sizes = [8, 128], strides = [1, 1]} : vector<8x384xf32> to vector<8x128xf32>
    %273 = vector.broadcast %3 : vector<1x128xf32> to vector<8x128xf32>
    %274 = arith.addf %272, %273 : vector<8x128xf32>
    %275 = arith.mulf %260, %274 : vector<8x128xf32>
    %276 = arith.addf %271, %275 : vector<8x128xf32>
    %277 = math.tanh %276 : vector<8x128xf32>
    %cst_96 = arith.constant 1.000000e+00 : f32
    %278 = vector.broadcast %cst_96 : f32 to vector<8x128xf32>
    %279 = arith.subf %278, %270 : vector<8x128xf32>
    %280 = arith.mulf %279, %277 : vector<8x128xf32>
    %281 = arith.mulf %270, %247 : vector<8x128xf32>
    %282 = arith.addf %280, %281 : vector<8x128xf32>
    %c5_i32 = arith.constant 5 : i32
    %283 = vector.broadcast %c5_i32 : i32 to vector<8x1xi32>
    %284 = arith.cmpi sgt, %4, %283 : vector<8x1xi32>
    %cst_97 = arith.constant 0.000000e+00 : f32
    %285 = vector.shape_cast %284 : vector<8x1xi1> to vector<8x1xi1>
    %286 = vector.broadcast %285 : vector<8x1xi1> to vector<8x128xi1>
    %287 = vector.broadcast %cst_97 : f32 to vector<8x128xf32>
    %288 = arith.select %286, %282, %287 : vector<8x128xi1>, vector<8x128xf32>
    %c5_98 = arith.constant 5 : index
    %c0_99 = arith.constant 0 : index
    %c0_100 = arith.constant 0 : index
    %289 = vector.load %arg7[%c5_98, %c0_99, %c0_100] : memref<8x8x128xf32, #tpu.memory_space<vmem>>, vector<1x8x128xf32>
    %290 = vector.shape_cast %289 : vector<1x8x128xf32> to vector<8x128xf32>
    %291 = vector.shape_cast %288 : vector<8x128xf32> to vector<1x8x128xf32>
    tpu.vector_store %arg7[%c5_98, %c0_99, %c0_100], %291 {strides = array<i32>} : memref<8x8x128xf32, #tpu.memory_space<vmem>>, vector<1x8x128xf32>,
    %292 = vector.shape_cast %284 : vector<8x1xi1> to vector<8x1xi1>
    %293 = vector.broadcast %292 : vector<8x1xi1> to vector<8x128xi1>
    %294 = arith.select %293, %282, %247 : vector<8x128xi1>, vector<8x128xf32>
    %c6 = arith.constant 6 : index
    %c0_101 = arith.constant 0 : index
    %c0_102 = arith.constant 0 : index
    %295 = vector.load %arg9[%c6, %c0_101, %c0_102] : memref<8x8x384xf32, #tpu.memory_space<vmem>>, vector<1x8x384xf32>
    %296 = vector.shape_cast %295 : vector<1x8x384xf32> to vector<8x384xf32>
    %cst_103 = arith.constant dense<0.000000e+00> : vector<8x384xf32>
    %297 = tpu.matmul %294, %1, %cst_103 {dimension_numbers = #tpu.dot_dimension_numbers<[1], [0], [0], [1], [0, 0, 1, 1], [], []>} : vector<8x128xf32>, vector<128x384xf32>, vector<8x384xf32> -> vector<8x384xf32>
    %298 = vector.extract_strided_slice %296 {offsets = [0, 0], sizes = [8, 128], strides = [1, 1]} : vector<8x384xf32> to vector<8x128xf32>
    %299 = vector.extract_strided_slice %297 {offsets = [0, 0], sizes = [8, 128], strides = [1, 1]} : vector<8x384xf32> to vector<8x128xf32>
    %300 = arith.addf %298, %299 : vector<8x128xf32>
    %cst_104 = arith.constant 5.000000e-01 : f32
    %301 = vector.broadcast %cst_104 : f32 to vector<8x128xf32>
    %302 = arith.mulf %301, %300 : vector<8x128xf32>
    %303 = math.tanh %302 : vector<8x128xf32>
    %cst_105 = arith.constant 1.000000e+00 : f32
    %304 = vector.broadcast %cst_105 : f32 to vector<8x128xf32>
    %305 = arith.addf %303, %304 : vector<8x128xf32>
    %cst_106 = arith.constant 5.000000e-01 : f32
    %306 = vector.broadcast %cst_106 : f32 to vector<8x128xf32>
    %307 = arith.mulf %306, %305 : vector<8x128xf32>
    %308 = vector.extract_strided_slice %296 {offsets = [0, 128], sizes = [8, 128], strides = [1, 1]} : vector<8x384xf32> to vector<8x128xf32>
    %309 = vector.extract_strided_slice %297 {offsets = [0, 128], sizes = [8, 128], strides = [1, 1]} : vector<8x384xf32> to vector<8x128xf32>
    %310 = arith.addf %308, %309 : vector<8x128xf32>
    %cst_107 = arith.constant 5.000000e-01 : f32
    %311 = vector.broadcast %cst_107 : f32 to vector<8x128xf32>
    %312 = arith.mulf %311, %310 : vector<8x128xf32>
    %313 = math.tanh %312 : vector<8x128xf32>
    %cst_108 = arith.constant 1.000000e+00 : f32
    %314 = vector.broadcast %cst_108 : f32 to vector<8x128xf32>
    %315 = arith.addf %313, %314 : vector<8x128xf32>
    %cst_109 = arith.constant 5.000000e-01 : f32
    %316 = vector.broadcast %cst_109 : f32 to vector<8x128xf32>
    %317 = arith.mulf %316, %315 : vector<8x128xf32>
    %318 = vector.extract_strided_slice %296 {offsets = [0, 256], sizes = [8, 128], strides = [1, 1]} : vector<8x384xf32> to vector<8x128xf32>
    %319 = vector.extract_strided_slice %297 {offsets = [0, 256], sizes = [8, 128], strides = [1, 1]} : vector<8x384xf32> to vector<8x128xf32>
    %320 = vector.broadcast %3 : vector<1x128xf32> to vector<8x128xf32>
    %321 = arith.addf %319, %320 : vector<8x128xf32>
    %322 = arith.mulf %307, %321 : vector<8x128xf32>
    %323 = arith.addf %318, %322 : vector<8x128xf32>
    %324 = math.tanh %323 : vector<8x128xf32>
    %cst_110 = arith.constant 1.000000e+00 : f32
    %325 = vector.broadcast %cst_110 : f32 to vector<8x128xf32>
    %326 = arith.subf %325, %317 : vector<8x128xf32>
    %327 = arith.mulf %326, %324 : vector<8x128xf32>
    %328 = arith.mulf %317, %294 : vector<8x128xf32>
    %329 = arith.addf %327, %328 : vector<8x128xf32>
    %c6_i32 = arith.constant 6 : i32
    %330 = vector.broadcast %c6_i32 : i32 to vector<8x1xi32>
    %331 = arith.cmpi sgt, %4, %330 : vector<8x1xi32>
    %cst_111 = arith.constant 0.000000e+00 : f32
    %332 = vector.shape_cast %331 : vector<8x1xi1> to vector<8x1xi1>
    %333 = vector.broadcast %332 : vector<8x1xi1> to vector<8x128xi1>
    %334 = vector.broadcast %cst_111 : f32 to vector<8x128xf32>
    %335 = arith.select %333, %329, %334 : vector<8x128xi1>, vector<8x128xf32>
    %c6_112 = arith.constant 6 : index
    %c0_113 = arith.constant 0 : index
    %c0_114 = arith.constant 0 : index
    %336 = vector.load %arg7[%c6_112, %c0_113, %c0_114] : memref<8x8x128xf32, #tpu.memory_space<vmem>>, vector<1x8x128xf32>
    %337 = vector.shape_cast %336 : vector<1x8x128xf32> to vector<8x128xf32>
    %338 = vector.shape_cast %335 : vector<8x128xf32> to vector<1x8x128xf32>
    tpu.vector_store %arg7[%c6_112, %c0_113, %c0_114], %338 {strides = array<i32>} : memref<8x8x128xf32, #tpu.memory_space<vmem>>, vector<1x8x128xf32>,
    %339 = vector.shape_cast %331 : vector<8x1xi1> to vector<8x1xi1>
    %340 = vector.broadcast %339 : vector<8x1xi1> to vector<8x128xi1>
    %341 = arith.select %340, %329, %294 : vector<8x128xi1>, vector<8x128xf32>
    %c7 = arith.constant 7 : index
    %c0_115 = arith.constant 0 : index
    %c0_116 = arith.constant 0 : index
    %342 = vector.load %arg9[%c7, %c0_115, %c0_116] : memref<8x8x384xf32, #tpu.memory_space<vmem>>, vector<1x8x384xf32>
    %343 = vector.shape_cast %342 : vector<1x8x384xf32> to vector<8x384xf32>
    %cst_117 = arith.constant dense<0.000000e+00> : vector<8x384xf32>
    %344 = tpu.matmul %341, %1, %cst_117 {dimension_numbers = #tpu.dot_dimension_numbers<[1], [0], [0], [1], [0, 0, 1, 1], [], []>} : vector<8x128xf32>, vector<128x384xf32>, vector<8x384xf32> -> vector<8x384xf32>
    %345 = vector.extract_strided_slice %343 {offsets = [0, 0], sizes = [8, 128], strides = [1, 1]} : vector<8x384xf32> to vector<8x128xf32>
    %346 = vector.extract_strided_slice %344 {offsets = [0, 0], sizes = [8, 128], strides = [1, 1]} : vector<8x384xf32> to vector<8x128xf32>
    %347 = arith.addf %345, %346 : vector<8x128xf32>
    %cst_118 = arith.constant 5.000000e-01 : f32
    %348 = vector.broadcast %cst_118 : f32 to vector<8x128xf32>
    %349 = arith.mulf %348, %347 : vector<8x128xf32>
    %350 = math.tanh %349 : vector<8x128xf32>
    %cst_119 = arith.constant 1.000000e+00 : f32
    %351 = vector.broadcast %cst_119 : f32 to vector<8x128xf32>
    %352 = arith.addf %350, %351 : vector<8x128xf32>
    %cst_120 = arith.constant 5.000000e-01 : f32
    %353 = vector.broadcast %cst_120 : f32 to vector<8x128xf32>
    %354 = arith.mulf %353, %352 : vector<8x128xf32>
    %355 = vector.extract_strided_slice %343 {offsets = [0, 128], sizes = [8, 128], strides = [1, 1]} : vector<8x384xf32> to vector<8x128xf32>
    %356 = vector.extract_strided_slice %344 {offsets = [0, 128], sizes = [8, 128], strides = [1, 1]} : vector<8x384xf32> to vector<8x128xf32>
    %357 = arith.addf %355, %356 : vector<8x128xf32>
    %cst_121 = arith.constant 5.000000e-01 : f32
    %358 = vector.broadcast %cst_121 : f32 to vector<8x128xf32>
    %359 = arith.mulf %358, %357 : vector<8x128xf32>
    %360 = math.tanh %359 : vector<8x128xf32>
    %cst_122 = arith.constant 1.000000e+00 : f32
    %361 = vector.broadcast %cst_122 : f32 to vector<8x128xf32>
    %362 = arith.addf %360, %361 : vector<8x128xf32>
    %cst_123 = arith.constant 5.000000e-01 : f32
    %363 = vector.broadcast %cst_123 : f32 to vector<8x128xf32>
    %364 = arith.mulf %363, %362 : vector<8x128xf32>
    %365 = vector.extract_strided_slice %343 {offsets = [0, 256], sizes = [8, 128], strides = [1, 1]} : vector<8x384xf32> to vector<8x128xf32>
    %366 = vector.extract_strided_slice %344 {offsets = [0, 256], sizes = [8, 128], strides = [1, 1]} : vector<8x384xf32> to vector<8x128xf32>
    %367 = vector.broadcast %3 : vector<1x128xf32> to vector<8x128xf32>
    %368 = arith.addf %366, %367 : vector<8x128xf32>
    %369 = arith.mulf %354, %368 : vector<8x128xf32>
    %370 = arith.addf %365, %369 : vector<8x128xf32>
    %371 = math.tanh %370 : vector<8x128xf32>
    %cst_124 = arith.constant 1.000000e+00 : f32
    %372 = vector.broadcast %cst_124 : f32 to vector<8x128xf32>
    %373 = arith.subf %372, %364 : vector<8x128xf32>
    %374 = arith.mulf %373, %371 : vector<8x128xf32>
    %375 = arith.mulf %364, %341 : vector<8x128xf32>
    %376 = arith.addf %374, %375 : vector<8x128xf32>
    %c7_i32 = arith.constant 7 : i32
    %377 = vector.broadcast %c7_i32 : i32 to vector<8x1xi32>
    %378 = arith.cmpi sgt, %4, %377 : vector<8x1xi32>
    %cst_125 = arith.constant 0.000000e+00 : f32
    %379 = vector.shape_cast %378 : vector<8x1xi1> to vector<8x1xi1>
    %380 = vector.broadcast %379 : vector<8x1xi1> to vector<8x128xi1>
    %381 = vector.broadcast %cst_125 : f32 to vector<8x128xf32>
    %382 = arith.select %380, %376, %381 : vector<8x128xi1>, vector<8x128xf32>
    %c7_126 = arith.constant 7 : index
    %c0_127 = arith.constant 0 : index
    %c0_128 = arith.constant 0 : index
    %383 = vector.load %arg7[%c7_126, %c0_127, %c0_128] : memref<8x8x128xf32, #tpu.memory_space<vmem>>, vector<1x8x128xf32>
    %384 = vector.shape_cast %383 : vector<1x8x128xf32> to vector<8x128xf32>
    %385 = vector.shape_cast %382 : vector<8x128xf32> to vector<1x8x128xf32>
    tpu.vector_store %arg7[%c7_126, %c0_127, %c0_128], %385 {strides = array<i32>} : memref<8x8x128xf32, #tpu.memory_space<vmem>>, vector<1x8x128xf32>,
    %386 = vector.shape_cast %378 : vector<8x1xi1> to vector<8x1xi1>
    %387 = vector.broadcast %386 : vector<8x1xi1> to vector<8x128xi1>
    %388 = arith.select %387, %376, %341 : vector<8x128xi1>, vector<8x128xf32>
    %c0_129 = arith.constant 0 : index
    %c0_130 = arith.constant 0 : index
    %389 = vector.load %arg8[%c0_129, %c0_130] : memref<8x128xf32, #tpu.memory_space<vmem>>, vector<8x128xf32>
    tpu.vector_store %arg8[%c0_129, %c0_130], %388 {strides = array<i32>} : memref<8x128xf32, #tpu.memory_space<vmem>>, vector<8x128xf32>,
    return
  }
  func.func @transform_0(%arg0: i32) -> (i32, i32, i32) {
    %c0_i32 = arith.constant 0 : i32
    %c0_i32_0 = arith.constant 0 : i32
    %c0_i32_1 = arith.constant 0 : i32
    return %c0_i32, %arg0, %c0_i32_0 : i32, i32, i32
  }
  func.func @transform_1(%arg0: i32) -> (i32, i32) {
    %c0_i32 = arith.constant 0 : i32
    %c0_i32_0 = arith.constant 0 : i32
    %c0_i32_1 = arith.constant 0 : i32
    return %c0_i32, %c0_i32_0 : i32, i32
  }
  func.func @transform_2(%arg0: i32) -> (i32, i32) {
    %c0_i32 = arith.constant 0 : i32
    %c0_i32_0 = arith.constant 0 : i32
    %c0_i32_1 = arith.constant 0 : i32
    return %c0_i32, %c0_i32_0 : i32, i32
  }
  func.func @transform_3(%arg0: i32) -> (i32, i32) {
    %c0_i32 = arith.constant 0 : i32
    %c0_i32_0 = arith.constant 0 : i32
    %c0_i32_1 = arith.constant 0 : i32
    return %c0_i32, %c0_i32_0 : i32, i32
  }
  func.func @transform_4(%arg0: i32) -> (i32, i32) {
    %c0_i32 = arith.constant 0 : i32
    %c0_i32_0 = arith.constant 0 : i32
    %c0_i32_1 = arith.constant 0 : i32
    return %c0_i32, %c0_i32_0 : i32, i32
  }
  func.func @transform_5(%arg0: i32) -> (i32, i32) {
    %c0_i32 = arith.constant 0 : i32
    %c0_i32_0 = arith.constant 0 : i32
    return %arg0, %c0_i32 : i32, i32
  }
  func.func @transform_6(%arg0: i32) -> (i32, i32, i32) {
    %c0_i32 = arith.constant 0 : i32
    %c0_i32_0 = arith.constant 0 : i32
    %c0_i32_1 = arith.constant 0 : i32
    return %c0_i32, %arg0, %c0_i32_0 : i32, i32, i32
  }
  func.func @transform_7(%arg0: i32) -> (i32, i32) {
    %c0_i32 = arith.constant 0 : i32
    %c0_i32_0 = arith.constant 0 : i32
    return %arg0, %c0_i32 : i32, i32
  }
}

</mosaic_0001>

<llo_original>
// kernel: tpu_custom_call.1
$region0: #{tpu_custom_call.1}
  #allocation0 [shape = 'u32[]', space=smem, size = 0x4, offset = 0x4, fixed_abs, tag = 'smem constant byte address 0x4 - core index']
  #allocation1 [shape = 'u32[144,128]{1,0:T(1,128)}', space=vmem, size = 0x12000, scoped, tag = 'internal scratch']
  #allocation2 [shape = 'f32[8,8,384]{2,1,0:T(8,128)}', space=vmem, size = 0x18000, scoped, tag = 'scratch operand']
  %s0 = inlined_call_operand.hbm [shape: f32[8,8,64], index: 0, kind: input, shape index: {}]
  %s1 = inlined_call_operand.hbm [shape: f32[64,384], index: 1, kind: input, shape index: {}]
  %s2 = inlined_call_operand.hbm [shape: f32[128,384], index: 2, kind: input, shape index: {}]
  %s3 = inlined_call_operand.vmem [shape: f32[1,384], index: 3, kind: input, shape index: {}]
  %s4 = inlined_call_operand.vmem [shape: f32[1,128], index: 4, kind: input, shape index: {}]
  %s5 = inlined_call_operand.vmem [shape: s32[8,1], index: 5, kind: input, shape index: {}]
  %s6 = inlined_call_operand.hbm [shape: f32[8,8,128], index: 6, kind: output, shape index: {0}]
  %s7 = inlined_call_operand.hbm [shape: f32[8,128], index: 7, kind: output, shape index: {1}]
  %8 = xla_tuple %s6, %s7
  %s9 = sld [smem:[#allocation0]]
  $region54: #{tpu_custom_call.1} parent=0
    _
  %s11 = ssub.s32 1, %s9
  %s12 = scalar_select 0, %s11, %s9
  $region1: #{tpu_custom_call.1} parent=0
    #allocation3 [shape = 'u8[32768]{0}', space=vmem, size = 0x8000, scoped, tag = 'input window, operand 0, single buffered']
    #allocation4 [shape = 's32[1]{0}', space=sflag, size = 0x4, scoped, tag = 'scoped memory for tpu_custom_call.1']
    #allocation5 [shape = 's32[1]{0}', space=sflag, size = 0x4, scoped, tag = 'scoped memory for tpu_custom_call.1']
    #allocation6 [shape = 'u8[98304]{0}', space=vmem, size = 0x18000, scoped, tag = 'input window, operand 1, single buffered']
    #allocation7 [shape = 's32[1]{0}', space=sflag, size = 0x4, scoped, tag = 'scoped memory for tpu_custom_call.1']
    #allocation8 [shape = 'u8[196608]{0}', space=vmem, size = 0x30000, scoped, tag = 'input window, operand 2, single buffered']
    #allocation9 [shape = 'u8[32768]{0}', space=vmem, size = 0x8000, scoped, tag = 'output window, operand 0, single buffered']
    #allocation10 [shape = 'u8[4096]{0}', space=vmem, size = 0x1000, scoped, tag = 'output window, operand 1, single buffered']
    #allocation11 [shape = 's32[1]{0}', space=sflag, size = 0x4, scoped, tag = 'scoped memory for tpu_custom_call.1']
    %13 = vsyncpa [#allocation4], 0
    %14 = vsyncpa [#allocation7], 0
    %15 = vsyncpa [#allocation5], 0
    %16 = vsyncpa [#allocation11], 0
    // Predicated region
    $region2: #{tpu_custom_call.1} parent=1 // pred_check
      _
    $region3: #{tpu_custom_call.1} parent=1 // pred_check_branch
      %18 = sbr.rel (0) target = $region5
    $region4: #{tpu_custom_call.1} parent=1 // pred_region
      %s20 = ssub.s32 1024, 1024
      %21 = vsyncadd [#allocation4], %s20
      %s22 = sshll.u32 [#allocation3], 4
      %s23 = int_to_ptr.vmem [resolvable:$true] %s22
      %28 = dma.hbm_to_vmem [thread:$0]  %s0, 1024, %s23, [#allocation4], 128, 128, 8
    $region5: #{tpu_custom_call.1} parent=1 // pred_fallthru
      _
    // Predicated region
    $region6: #{tpu_custom_call.1} parent=1 // pred_check
      _
    $region7: #{tpu_custom_call.1} parent=1 // pred_check_branch
      %30 = sbr.rel (0) target = $region9
    $region8: #{tpu_custom_call.1} parent=1 // pred_region
      %s32 = ssub.s32 3072, 3072
      %33 = vsyncadd [#allocation7], %s32
      %s34 = sshll.u32 [#allocation6], 4
      %s35 = int_to_ptr.vmem [resolvable:$true] %s34
      %40 = dma.hbm_to_vmem [thread:$0]  %s1, 3072, %s35, [#allocation7], 384, 384, 24
    $region9: #{tpu_custom_call.1} parent=1 // pred_fallthru
      _
    // Predicated region
    $region10: #{tpu_custom_call.1} parent=1 // pred_check
      _
    $region11: #{tpu_custom_call.1} parent=1 // pred_check_branch
      %42 = sbr.rel (0) target = $region13
    $region12: #{tpu_custom_call.1} parent=1 // pred_region
      %s44 = ssub.s32 6144, 6144
      %45 = vsyncadd [#allocation7], %s44
      %s46 = sshll.u32 [#allocation8], 4
      %s47 = int_to_ptr.vmem [resolvable:$true] %s46
      %52 = dma.hbm_to_vmem [thread:$0]  %s2, 6144, %s47, [#allocation7], 384, 384, 24
    $region13: #{tpu_custom_call.1} parent=1 // pred_fallthru
      _
    // Predicated region
    $region14: #{tpu_custom_call.1} parent=1 // pred_check
      _
    $region15: #{tpu_custom_call.1} parent=1 // pred_check_branch
      %54 = sbr.rel (0) target = $region17
    $region16: #{tpu_custom_call.1} parent=1 // pred_region
      _
    $region17: #{tpu_custom_call.1} parent=1 // pred_fallthru
      _
    // Predicated region
    $region18: #{tpu_custom_call.1} parent=1 // pred_check
      _
    $region19: #{tpu_custom_call.1} parent=1 // pred_check_branch
      %56 = sbr.rel (0) target = $region21
    $region20: #{tpu_custom_call.1} parent=1 // pred_region
      _
    $region21: #{tpu_custom_call.1} parent=1 // pred_fallthru
      _
    // Predicated region
    $region22: #{tpu_custom_call.1} parent=1 // pred_check
      _
    $region23: #{tpu_custom_call.1} parent=1 // pred_check_branch
      %58 = sbr.rel (0) target = $region25
    $region24: #{tpu_custom_call.1} parent=1 // pred_region
      _
    $region25: #{tpu_custom_call.1} parent=1 // pred_fallthru
      _
    // Predicated region
    $region26: #{tpu_custom_call.1} parent=1 // pred_check
      _
    $region27: #{tpu_custom_call.1} parent=1 // pred_check_branch
      %60 = sbr.rel (0) target = $region29
    $region28: #{tpu_custom_call.1} parent=1 // pred_region
      %61 = dma.done [#allocation4], 1024
    $region29: #{tpu_custom_call.1} parent=1 // pred_fallthru
      _
    // Predicated region
    $region30: #{tpu_custom_call.1} parent=1 // pred_check
      _
    $region31: #{tpu_custom_call.1} parent=1 // pred_check_branch
      %63 = sbr.rel (0) target = $region33
    $region32: #{tpu_custom_call.1} parent=1 // pred_region
      %64 = dma.done [#allocation7], 3072
    $region33: #{tpu_custom_call.1} parent=1 // pred_fallthru
      _
    // Predicated region
    $region34: #{tpu_custom_call.1} parent=1 // pred_check
      _
    $region35: #{tpu_custom_call.1} parent=1 // pred_check_branch
      %66 = sbr.rel (0) target = $region37
    $region36: #{tpu_custom_call.1} parent=1 // pred_region
      %67 = dma.done [#allocation7], 6144
    $region37: #{tpu_custom_call.1} parent=1 // pred_fallthru
      _
    %v68 = vld [vmem:[#allocation6] sm:$0xff]
    %v69 = vld [vmem:[#allocation6 + $0x8] sm:$0xff]
    %v70 = vld [vmem:[#allocation6 + $0x10] sm:$0xff]
    %v71 = vld [vmem:[#allocation6 + $0x18] sm:$0xff]
    %v72 = vld [vmem:[#allocation6 + $0x20] sm:$0xff]
    %v73 = vld [vmem:[#allocation6 + $0x28] sm:$0xff]
    %v74 = vld [vmem:[#allocation6 + $0x30] sm:$0xff]
    %v75 = vld [vmem:[#allocation6 + $0x38] sm:$0xff]
    %v76 = vld [vmem:[#allocation6 + $0x40] sm:$0xff]
    %v77 = vld [vmem:[#allocation6 + $0x48] sm:$0xff]
    %v78 = vld [vmem:[#allocation6 + $0x50] sm:$0xff]
    %v79 = vld [vmem:[#allocation6 + $0x58] sm:$0xff]
    %v80 = vld [vmem:[#allocation6 + $0x60] sm:$0xff]
    %v81 = vld [vmem:[#allocation6 + $0x68] sm:$0xff]
    %v82 = vld [vmem:[#allocation6 + $0x70] sm:$0xff]
    %v83 = vld [vmem:[#allocation6 + $0x78] sm:$0xff]
    %v84 = vld [vmem:[#allocation6 + $0x80] sm:$0xff]
    %v85 = vld [vmem:[#allocation6 + $0x88] sm:$0xff]
    %v86 = vld [vmem:[#allocation6 + $0x90] sm:$0xff]
    %v87 = vld [vmem:[#allocation6 + $0x98] sm:$0xff]
    %v88 = vld [vmem:[#allocation6 + $0xa0] sm:$0xff]
    %v89 = vld [vmem:[#allocation6 + $0xa8] sm:$0xff]
    %v90 = vld [vmem:[#allocation6 + $0xb0] sm:$0xff]
    %v91 = vld [vmem:[#allocation6 + $0xb8] sm:$0xff]
    %v92 = vld [vmem:[#allocation8] sm:$0xff]
    %v93 = vld [vmem:[#allocation8 + $0x8] sm:$0xff]
    %v94 = vld [vmem:[#allocation8 + $0x10] sm:$0xff]
    %v95 = vld [vmem:[#allocation8 + $0x18] sm:$0xff]
    %v96 = vld [vmem:[#allocation8 + $0x20] sm:$0xff]
    %v97 = vld [vmem:[#allocation8 + $0x28] sm:$0xff]
    %v98 = vld [vmem:[#allocation8 + $0x30] sm:$0xff]
    %v99 = vld [vmem:[#allocation8 + $0x38] sm:$0xff]
    %v100 = vld [vmem:[#allocation8 + $0x40] sm:$0xff]
    %v101 = vld [vmem:[#allocation8 + $0x48] sm:$0xff]
    %v102 = vld [vmem:[#allocation8 + $0x50] sm:$0xff]
    %v103 = vld [vmem:[#allocation8 + $0x58] sm:$0xff]
    %v104 = vld [vmem:[#allocation8 + $0x60] sm:$0xff]
    %v105 = vld [vmem:[#allocation8 + $0x68] sm:$0xff]
    %v106 = vld [vmem:[#allocation8 + $0x70] sm:$0xff]
    %v107 = vld [vmem:[#allocation8 + $0x78] sm:$0xff]
    %v108 = vld [vmem:[#allocation8 + $0x80] sm:$0xff]
    %v109 = vld [vmem:[#allocation8 + $0x88] sm:$0xff]
    %v110 = vld [vmem:[#allocation8 + $0x90] sm:$0xff]
    %v111 = vld [vmem:[#allocation8 + $0x98] sm:$0xff]
    %v112 = vld [vmem:[#allocation8 + $0xa0] sm:$0xff]
    %v113 = vld [vmem:[#allocation8 + $0xa8] sm:$0xff]
    %v114 = vld [vmem:[#allocation8 + $0xb0] sm:$0xff]
    %v115 = vld [vmem:[#allocation8 + $0xb8] sm:$0xff]
    %v116 = vld [vmem:[#allocation8 + $0xc0] sm:$0xff]
    %v117 = vld [vmem:[#allocation8 + $0xc8] sm:$0xff]
    %v118 = vld [vmem:[#allocation8 + $0xd0] sm:$0xff]
    %v119 = vld [vmem:[#allocation8 + $0xd8] sm:$0xff]
    %v120 = vld [vmem:[#allocation8 + $0xe0] sm:$0xff]
    %v121 = vld [vmem:[#allocation8 + $0xe8] sm:$0xff]
    %v122 = vld [vmem:[#allocation8 + $0xf0] sm:$0xff]
    %v123 = vld [vmem:[#allocation8 + $0xf8] sm:$0xff]
    %v124 = vld [vmem:[#allocation8 + $0x100] sm:$0xff]
    %v125 = vld [vmem:[#allocation8 + $0x108] sm:$0xff]
    %v126 = vld [vmem:[#allocation8 + $0x110] sm:$0xff]
    %v127 = vld [vmem:[#allocation8 + $0x118] sm:$0xff]
    %v128 = vld [vmem:[#allocation8 + $0x120] sm:$0xff]
    %v129 = vld [vmem:[#allocation8 + $0x128] sm:$0xff]
    %v130 = vld [vmem:[#allocation8 + $0x130] sm:$0xff]
    %v131 = vld [vmem:[#allocation8 + $0x138] sm:$0xff]
    %v132 = vld [vmem:[#allocation8 + $0x140] sm:$0xff]
    %v133 = vld [vmem:[#allocation8 + $0x148] sm:$0xff]
    %v134 = vld [vmem:[#allocation8 + $0x150] sm:$0xff]
    %v135 = vld [vmem:[#allocation8 + $0x158] sm:$0xff]
    %v136 = vld [vmem:[#allocation8 + $0x160] sm:$0xff]
    %v137 = vld [vmem:[#allocation8 + $0x168] sm:$0xff]
    %v138 = vld [vmem:[#allocation8 + $0x170] sm:$0xff]
    %v139 = vld [vmem:[#allocation8 + $0x178] sm:$0xff]
    %v140 = vld [vmem:[%s3] sm:$0x7]
    %v141 = vld [vmem:[%s4] sm:$0x1]
    %v142 = vld [vmem:[%s5] sm:$0xff]
    %v143 = vld [vmem:[#allocation3] sm:$0xff]
    %v144 = vld [vmem:[#allocation3 + $0x8] sm:$0xff]
    %v145 = vld [vmem:[#allocation3 + $0x10] sm:$0xff]
    %v146 = vld [vmem:[#allocation3 + $0x18] sm:$0xff]
    %v147 = vld [vmem:[#allocation3 + $0x20] sm:$0xff]
    %v148 = vld [vmem:[#allocation3 + $0x28] sm:$0xff]
    %v149 = vld [vmem:[#allocation3 + $0x30] sm:$0xff]
    %v150 = vld [vmem:[#allocation3 + $0x38] sm:$0xff]
    %v152 = vlaneseq
    %v153 = vshrl.u32 %v152, 7
    %v154 = vsub.s32 0, %v153
    %v155 = vrot.slane %v140, %v154
    %v156 = vlaneseq
    %v157 = vshrl.u32 %v156, 7
    %v158 = vsub.s32 1, %v157
    %v159 = vrot.slane %v140, %v158
    %v160 = vlaneseq
    %v161 = vshrl.u32 %v160, 7
    %v162 = vsub.s32 2, %v161
    %v163 = vrot.slane %v140, %v162
    %vm167 = vcmask 523264
    %v169 = vsel %vm167, %v143, 0
    %v172 = vsel %vm167, %v144, 0
    %v175 = vsel %vm167, %v145, 0
    %v178 = vsel %vm167, %v146, 0
    %v181 = vsel %vm167, %v147, 0
    %v184 = vsel %vm167, %v148, 0
    %v187 = vsel %vm167, %v149, 0
    %v190 = vsel %vm167, %v150, 0
    %192 = vmatprep.subr.mxu0 %v69
    %193 = vmatpush1.msra.mxu0 %v68
    %194 = vmatprep.subr.mxu0 %v72
    %195 = vmatpush1.msra.mxu0 %v71
    %196 = vmatprep.subr.mxu0 %v75
    %197 = vmatpush1.msra.mxu0 %v74
    %198 = vmatprep.subr.mxu0 %v78
    %199 = vmatpush1.msra.mxu0 %v77
    %200 = vmatprep.subr.mxu0 %v81
    %201 = vmatpush1.msra.mxu0 %v80
    %202 = vmatprep.subr.mxu0 %v84
    %203 = vmatpush1.msra.mxu0 %v83
    %204 = vmatprep.subr.mxu0 %v87
    %205 = vmatpush1.msra.mxu0 %v86
    %206 = vmatprep.subr.mxu0 %v90
    %207 = vmatpush1.msra.mxu0 %v89
    %208 = vmatprep.subr.mxu0 0.0
    %209 = vmatpush1.msra.mxu0 0.0
    %210 = vmatprep.subr.mxu0 0.0
    %211 = vmatpush1.msra.mxu0 0.0
    %212 = vmatprep.subr.mxu0 0.0
    %213 = vmatpush1.msra.mxu0 0.0
    %214 = vmatprep.subr.mxu0 0.0
    %215 = vmatpush1.msra.mxu0 0.0
    %216 = vmatprep.subr.mxu0 0.0
    %217 = vmatpush1.msra.mxu0 0.0
    %218 = vmatprep.subr.mxu0 0.0
    %219 = vmatpush1.msra.mxu0 0.0
    %220 = vmatprep.subr.mxu0 0.0
    %221 = vmatpush1.msra.mxu0 0.0
    %222 = vmatprep.subr.mxu0 0.0
    %223 = vmatpush1.msra.mxu0 0.0
    %224 = vmatprep.subr.mxu0 0.0
    %225 = vmatpush1.msra.mxu0 0.0
    %226 = vmatprep.subr.mxu0 0.0
    %227 = vmatpush1.msra.mxu0 0.0
    %228 = vmatprep.subr.mxu0 0.0
    %229 = vmatpush1.msra.mxu0 0.0
    %230 = vmatprep.subr.mxu0 0.0
    %231 = vmatpush1.msra.mxu0 0.0
    %232 = vmatprep.subr.mxu0 0.0
    %233 = vmatpush1.msra.mxu0 0.0
    %234 = vmatprep.subr.mxu0 0.0
    %235 = vmatpush1.msra.mxu0 0.0
    %236 = vmatprep.subr.mxu0 0.0
    %237 = vmatpush1.msra.mxu0 0.0
    %238 = vmatprep.subr.mxu0 0.0
    %239 = vmatpush1.msra.mxu0 0.0
    %240 = vmatprep.subr.mxu0 0.0
    %241 = vmatpush1.msra.mxu0 0.0
    %242 = vmatprep.subr.mxu0 0.0
    %243 = vmatpush1.msra.mxu0 0.0
    %244 = vmatprep.subr.mxu0 0.0
    %245 = vmatpush1.msra.mxu0 0.0
    %246 = vmatprep.subr.mxu0 0.0
    %247 = vmatpush1.msra.mxu0 0.0
    %248 = vmatprep.subr.mxu0 0.0
    %249 = vmatpush1.msra.mxu0 0.0
    %250 = vmatprep.subr.mxu0 0.0
    %251 = vmatpush1.msra.mxu0 0.0
    %252 = vmatprep.subr.mxu0 0.0
    %253 = vmatpush1.msra.mxu0 0.0
    %254 = vmatprep.subr.mxu0 0.0
    %255 = vmatpush1.msra.mxu0 0.0
    %256 = vmatprep.mubr.f32.mxu0 0.0
    %257 = vmatmul.mubr.f32.gmra.mrb[0].mxu0 %v169
    %v258 = vpop.f32.mrb[0].mxu0
    %v259 = vadd.f32 %v155, %v258
    %v260 = vpop.f32.mrb[0].mxu0
    %v261 = vadd.f32 %v159, %v260
    %262 = vmatprep.mubr.f32.mxu0 0.0
    %263 = vmatmul.mubr.f32.gmra.mrb[0].mxu0 %v172
    %v264 = vpop.f32.mrb[0].mxu0
    %v265 = vadd.f32 %v155, %v264
    %v266 = vpop.f32.mrb[0].mxu0
    %v267 = vadd.f32 %v159, %v266
    %268 = vmatprep.mubr.f32.mxu0 0.0
    %269 = vmatmul.mubr.f32.gmra.mrb[0].mxu0 %v175
    %v270 = vpop.f32.mrb[0].mxu0
    %v271 = vadd.f32 %v155, %v270
    %v272 = vpop.f32.mrb[0].mxu0
    %v273 = vadd.f32 %v159, %v272
    %274 = vmatprep.mubr.f32.mxu0 0.0
    %275 = vmatmul.mubr.f32.gmra.mrb[0].mxu0 %v178
    %v276 = vpop.f32.mrb[0].mxu0
    %v277 = vadd.f32 %v155, %v276
    %v278 = vpop.f32.mrb[0].mxu0
    %v279 = vadd.f32 %v159, %v278
    %280 = vmatprep.mubr.f32.mxu0 0.0
    %281 = vmatmul.mubr.f32.gmra.mrb[0].mxu0 %v181
    %v282 = vpop.f32.mrb[0].mxu0
    %v283 = vadd.f32 %v155, %v282
    %v284 = vpop.f32.mrb[0].mxu0
    %v285 = vadd.f32 %v159, %v284
    %286 = vmatprep.mubr.f32.mxu0 0.0
    %287 = vmatmul.mubr.f32.gmra.mrb[0].mxu0 %v184
    %v288 = vpop.f32.mrb[0].mxu0
    %v289 = vadd.f32 %v155, %v288
    %v290 = vpop.f32.mrb[0].mxu0
    %v291 = vadd.f32 %v159, %v290
    %292 = vmatprep.mubr.f32.mxu0 0.0
    %293 = vmatmul.mubr.f32.gmra.mrb[0].mxu0 %v187
    %v294 = vpop.f32.mrb[0].mxu0
    %v295 = vadd.f32 %v155, %v294
    %v296 = vpop.f32.mrb[0].mxu0
    %v297 = vadd.f32 %v159, %v296
    %298 = vmatprep.mubr.f32.mxu0 0.0
    %299 = vmatmul.mubr.f32.gmra.mrb[0].mxu0 %v190
    %v300 = vpop.f32.mrb[0].mxu0
    %v301 = vadd.f32 %v155, %v300
    %v302 = vpop.f32.mrb[0].mxu0
    %v303 = vadd.f32 %v159, %v302
    %304 = vdwg.mxu0
    %305 = vmatprep.subr.mxu0 0.0
    %306 = vmatpush1.msra.mxu0 %v70
    %307 = vmatprep.subr.mxu0 0.0
    %308 = vmatpush1.msra.mxu0 %v73
    %309 = vmatprep.subr.mxu0 0.0
    %310 = vmatpush1.msra.mxu0 %v76
    %311 = vmatprep.subr.mxu0 0.0
    %312 = vmatpush1.msra.mxu0 %v79
    %313 = vmatprep.subr.mxu0 0.0
    %314 = vmatpush1.msra.mxu0 %v82
    %315 = vmatprep.subr.mxu0 0.0
    %316 = vmatpush1.msra.mxu0 %v85
    %317 = vmatprep.subr.mxu0 0.0
    %318 = vmatpush1.msra.mxu0 %v88
    %319 = vmatprep.subr.mxu0 0.0
    %320 = vmatpush1.msra.mxu0 %v91
    %321 = vmatprep.subr.mxu0 0.0
    %322 = vmatpush1.msra.mxu0 0.0
    %323 = vmatprep.subr.mxu0 0.0
    %324 = vmatpush1.msra.mxu0 0.0
    %325 = vmatprep.subr.mxu0 0.0
    %326 = vmatpush1.msra.mxu0 0.0
    %327 = vmatprep.subr.mxu0 0.0
    %328 = vmatpush1.msra.mxu0 0.0
    %329 = vmatprep.subr.mxu0 0.0
    %330 = vmatpush1.msra.mxu0 0.0
    %331 = vmatprep.subr.mxu0 0.0
    %332 = vmatpush1.msra.mxu0 0.0
    %333 = vmatprep.subr.mxu0 0.0
    %334 = vmatpush1.msra.mxu0 0.0
    %335 = vmatprep.subr.mxu0 0.0
    %336 = vmatpush1.msra.mxu0 0.0
    %337 = vmatprep.subr.mxu0 0.0
    %338 = vmatpush1.msra.mxu0 0.0
    %339 = vmatprep.subr.mxu0 0.0
    %340 = vmatpush1.msra.mxu0 0.0
    %341 = vmatprep.subr.mxu0 0.0
    %342 = vmatpush1.msra.mxu0 0.0
    %343 = vmatprep.subr.mxu0 0.0
    %344 = vmatpush1.msra.mxu0 0.0
    %345 = vmatprep.subr.mxu0 0.0
    %346 = vmatpush1.msra.mxu0 0.0
    %347 = vmatprep.subr.mxu0 0.0
    %348 = vmatpush1.msra.mxu0 0.0
    %349 = vmatprep.subr.mxu0 0.0
    %350 = vmatpush1.msra.mxu0 0.0
    %351 = vmatprep.subr.mxu0 0.0
    %352 = vmatpush1.msra.mxu0 0.0
    %353 = vmatprep.subr.mxu0 0.0
    %354 = vmatpush1.msra.mxu0 0.0
    %355 = vmatprep.subr.mxu0 0.0
    %356 = vmatpush1.msra.mxu0 0.0
    %357 = vmatprep.subr.mxu0 0.0
    %358 = vmatpush1.msra.mxu0 0.0
    %359 = vmatprep.subr.mxu0 0.0
    %360 = vmatpush1.msra.mxu0 0.0
    %361 = vmatprep.subr.mxu0 0.0
    %362 = vmatpush1.msra.mxu0 0.0
    %363 = vmatprep.subr.mxu0 0.0
    %364 = vmatpush1.msra.mxu0 0.0
    %365 = vmatprep.subr.mxu0 0.0
    %366 = vmatpush1.msra.mxu0 0.0
    %367 = vmatprep.subr.mxu0 0.0
    %368 = vmatpush1.msra.mxu0 0.0
    %369 = vmatprep.mubr.f32.mxu0 0.0
    %370 = vmatmul.mubr.f32.gmra.mrb[0].mxu0 %v169
    %v371 = vpop.f32.mrb[0].mxu0
    %v372 = vadd.f32 %v163, %v371
    %v373 = vpop.f32.mrb[0].mxu0
    %374 = vmatprep.mubr.f32.mxu0 0.0
    %375 = vmatmul.mubr.f32.gmra.mrb[0].mxu0 %v172
    %v376 = vpop.f32.mrb[0].mxu0
    %v377 = vadd.f32 %v163, %v376
    %v378 = vpop.f32.mrb[0].mxu0
    %379 = vmatprep.mubr.f32.mxu0 0.0
    %380 = vmatmul.mubr.f32.gmra.mrb[0].mxu0 %v175
    %v381 = vpop.f32.mrb[0].mxu0
    %v382 = vadd.f32 %v163, %v381
    %v383 = vpop.f32.mrb[0].mxu0
    %384 = vmatprep.mubr.f32.mxu0 0.0
    %385 = vmatmul.mubr.f32.gmra.mrb[0].mxu0 %v178
    %v386 = vpop.f32.mrb[0].mxu0
    %v387 = vadd.f32 %v163, %v386
    %v388 = vpop.f32.mrb[0].mxu0
    %389 = vmatprep.mubr.f32.mxu0 0.0
    %390 = vmatmul.mubr.f32.gmra.mrb[0].mxu0 %v181
    %v391 = vpop.f32.mrb[0].mxu0
    %v392 = vadd.f32 %v163, %v391
    %v393 = vpop.f32.mrb[0].mxu0
    %394 = vmatprep.mubr.f32.mxu0 0.0
    %395 = vmatmul.mubr.f32.gmra.mrb[0].mxu0 %v184
    %v396 = vpop.f32.mrb[0].mxu0
    %v397 = vadd.f32 %v163, %v396
    %v398 = vpop.f32.mrb[0].mxu0
    %399 = vmatprep.mubr.f32.mxu0 0.0
    %400 = vmatmul.mubr.f32.gmra.mrb[0].mxu0 %v187
    %v401 = vpop.f32.mrb[0].mxu0
    %v402 = vadd.f32 %v163, %v401
    %v403 = vpop.f32.mrb[0].mxu0
    %404 = vmatprep.mubr.f32.mxu0 0.0
    %405 = vmatmul.mubr.f32.gmra.mrb[0].mxu0 %v190
    %v406 = vpop.f32.mrb[0].mxu0
    %v407 = vadd.f32 %v163, %v406
    %v408 = vpop.f32.mrb[0].mxu0
    %409 = vdwg.mxu0
    %410 = vst [vmem:[#allocation2] sm:$0xff] %v259
    %411 = vst [vmem:[#allocation2 + $0x8] sm:$0xff] %v261
    %412 = vst [vmem:[#allocation2 + $0x10] sm:$0xff] %v372
    %413 = vst [vmem:[#allocation2 + $0x18] sm:$0xff] %v265
    %414 = vst [vmem:[#allocation2 + $0x20] sm:$0xff] %v267
    %415 = vst [vmem:[#allocation2 + $0x28] sm:$0xff] %v377
    %416 = vst [vmem:[#allocation2 + $0x30] sm:$0xff] %v271
    %417 = vst [vmem:[#allocation2 + $0x38] sm:$0xff] %v273
    %418 = vst [vmem:[#allocation2 + $0x40] sm:$0xff] %v382
    %419 = vst [vmem:[#allocation2 + $0x48] sm:$0xff] %v277
    %420 = vst [vmem:[#allocation2 + $0x50] sm:$0xff] %v279
    %421 = vst [vmem:[#allocation2 + $0x58] sm:$0xff] %v387
    %422 = vst [vmem:[#allocation2 + $0x60] sm:$0xff] %v283
    %423 = vst [vmem:[#allocation2 + $0x68] sm:$0xff] %v285
    %424 = vst [vmem:[#allocation2 + $0x70] sm:$0xff] %v392
    %425 = vst [vmem:[#allocation2 + $0x78] sm:$0xff] %v289
    %426 = vst [vmem:[#allocation2 + $0x80] sm:$0xff] %v291
    %427 = vst [vmem:[#allocation2 + $0x88] sm:$0xff] %v397
    %428 = vst [vmem:[#allocation2 + $0x90] sm:$0xff] %v295
    %429 = vst [vmem:[#allocation2 + $0x98] sm:$0xff] %v297
    %430 = vst [vmem:[#allocation2 + $0xa0] sm:$0xff] %v402
    %431 = vst [vmem:[#allocation2 + $0xa8] sm:$0xff] %v301
    %432 = vst [vmem:[#allocation2 + $0xb0] sm:$0xff] %v303
    %433 = vst [vmem:[#allocation2 + $0xb8] sm:$0xff] %v407
    %v434 = vld [vmem:[#allocation2] sm:$0xff]
    %v435 = vld [vmem:[#allocation2 + $0x8] sm:$0xff]
    %v436 = vld [vmem:[#allocation2 + $0x10] sm:$0xff]
    %437 = vmatprep.subr.mxu0 %v93
    %438 = vmatpush1.msra.mxu0 %v92
    %439 = vmatprep.subr.mxu0 %v96
    %440 = vmatpush1.msra.mxu0 %v95
    %441 = vmatprep.subr.mxu0 %v99
    %442 = vmatpush1.msra.mxu0 %v98
    %443 = vmatprep.subr.mxu0 %v102
    %444 = vmatpush1.msra.mxu0 %v101
    %445 = vmatprep.subr.mxu0 %v105
    %446 = vmatpush1.msra.mxu0 %v104
    %447 = vmatprep.subr.mxu0 %v108
    %448 = vmatpush1.msra.mxu0 %v107
    %449 = vmatprep.subr.mxu0 %v111
    %450 = vmatpush1.msra.mxu0 %v110
    %451 = vmatprep.subr.mxu0 %v114
    %452 = vmatpush1.msra.mxu0 %v113
    %453 = vmatprep.subr.mxu0 %v117
    %454 = vmatpush1.msra.mxu0 %v116
    %455 = vmatprep.subr.mxu0 %v120
    %456 = vmatpush1.msra.mxu0 %v119
    %457 = vmatprep.subr.mxu0 %v123
    %458 = vmatpush1.msra.mxu0 %v122
    %459 = vmatprep.subr.mxu0 %v126
    %460 = vmatpush1.msra.mxu0 %v125
    %461 = vmatprep.subr.mxu0 %v129
    %462 = vmatpush1.msra.mxu0 %v128
    %463 = vmatprep.subr.mxu0 %v132
    %464 = vmatpush1.msra.mxu0 %v131
    %465 = vmatprep.subr.mxu0 %v135
    %466 = vmatpush1.msra.mxu0 %v134
    %467 = vmatprep.subr.mxu0 %v138
    %468 = vmatpush1.msra.mxu0 %v137
    %469 = vmatprep.subr.mxu0 0.0
    %470 = vmatpush1.msra.mxu0 0.0
    %471 = vmatprep.subr.mxu0 0.0
    %472 = vmatpush1.msra.mxu0 0.0
    %473 = vmatprep.subr.mxu0 0.0
    %474 = vmatpush1.msra.mxu0 0.0
    %475 = vmatprep.subr.mxu0 0.0
    %476 = vmatpush1.msra.mxu0 0.0
    %477 = vmatprep.subr.mxu0 0.0
    %478 = vmatpush1.msra.mxu0 0.0
    %479 = vmatprep.subr.mxu0 0.0
    %480 = vmatpush1.msra.mxu0 0.0
    %481 = vmatprep.subr.mxu0 0.0
    %482 = vmatpush1.msra.mxu0 0.0
    %483 = vmatprep.subr.mxu0 0.0
    %484 = vmatpush1.msra.mxu0 0.0
    %485 = vmatprep.subr.mxu0 0.0
    %486 = vmatpush1.msra.mxu0 0.0
    %487 = vmatprep.subr.mxu0 0.0
    %488 = vmatpush1.msra.mxu0 0.0
    %489 = vmatprep.subr.mxu0 0.0
    %490 = vmatpush1.msra.mxu0 0.0
    %491 = vmatprep.subr.mxu0 0.0
    %492 = vmatpush1.msra.mxu0 0.0
    %493 = vmatprep.subr.mxu0 0.0
    %494 = vmatpush1.msra.mxu0 0.0
    %495 = vmatprep.subr.mxu0 0.0
    %496 = vmatpush1.msra.mxu0 0.0
    %497 = vmatprep.subr.mxu0 0.0
    %498 = vmatpush1.msra.mxu0 0.0
    %499 = vmatprep.subr.mxu0 0.0
    %500 = vmatpush1.msra.mxu0 0.0
    %501 = vmatprep.mubr.f32.mxu0 0.0
    %502 = vmatmul.mubr.f32.gmra.mrb[0].mxu0 0.0
    %v503 = vpop.f32.mrb[0].mxu0
    %v504 = vadd.f32 0.0, %v503
    %v505 = vpop.f32.mrb[0].mxu0
    %v506 = vadd.f32 0.0, %v505
    %507 = vdwg.mxu0
    %508 = vmatprep.subr.mxu0 0.0
    %509 = vmatpush1.msra.mxu0 %v94
    %510 = vmatprep.subr.mxu0 0.0
    %511 = vmatpush1.msra.mxu0 %v97
    %512 = vmatprep.subr.mxu0 0.0
    %513 = vmatpush1.msra.mxu0 %v100
    %514 = vmatprep.subr.mxu0 0.0
    %515 = vmatpush1.msra.mxu0 %v103
    %516 = vmatprep.subr.mxu0 0.0
    %517 = vmatpush1.msra.mxu0 %v106
    %518 = vmatprep.subr.mxu0 0.0
    %519 = vmatpush1.msra.mxu0 %v109
    %520 = vmatprep.subr.mxu0 0.0
    %521 = vmatpush1.msra.mxu0 %v112
    %522 = vmatprep.subr.mxu0 0.0
    %523 = vmatpush1.msra.mxu0 %v115
    %524 = vmatprep.subr.mxu0 0.0
    %525 = vmatpush1.msra.mxu0 %v118
    %526 = vmatprep.subr.mxu0 0.0
    %527 = vmatpush1.msra.mxu0 %v121
    %528 = vmatprep.subr.mxu0 0.0
    %529 = vmatpush1.msra.mxu0 %v124
    %530 = vmatprep.subr.mxu0 0.0
    %531 = vmatpush1.msra.mxu0 %v127
    %532 = vmatprep.subr.mxu0 0.0
    %533 = vmatpush1.msra.mxu0 %v130
    %534 = vmatprep.subr.mxu0 0.0
    %535 = vmatpush1.msra.mxu0 %v133
    %536 = vmatprep.subr.mxu0 0.0
    %537 = vmatpush1.msra.mxu0 %v136
    %538 = vmatprep.subr.mxu0 0.0
    %539 = vmatpush1.msra.mxu0 %v139
    %540 = vmatprep.subr.mxu0 0.0
    %541 = vmatpush1.msra.mxu0 0.0
    %542 = vmatprep.subr.mxu0 0.0
    %543 = vmatpush1.msra.mxu0 0.0
    %544 = vmatprep.subr.mxu0 0.0
    %545 = vmatpush1.msra.mxu0 0.0
    %546 = vmatprep.subr.mxu0 0.0
    %547 = vmatpush1.msra.mxu0 0.0
    %548 = vmatprep.subr.mxu0 0.0
    %549 = vmatpush1.msra.mxu0 0.0
    %550 = vmatprep.subr.mxu0 0.0
    %551 = vmatpush1.msra.mxu0 0.0
    %552 = vmatprep.subr.mxu0 0.0
    %553 = vmatpush1.msra.mxu0 0.0
    %554 = vmatprep.subr.mxu0 0.0
    %555 = vmatpush1.msra.mxu0 0.0
    %556 = vmatprep.subr.mxu0 0.0
    %557 = vmatpush1.msra.mxu0 0.0
    %558 = vmatprep.subr.mxu0 0.0
    %559 = vmatpush1.msra.mxu0 0.0
    %560 = vmatprep.subr.mxu0 0.0
    %561 = vmatpush1.msra.mxu0 0.0
    %562 = vmatprep.subr.mxu0 0.0
    %563 = vmatpush1.msra.mxu0 0.0
    %564 = vmatprep.subr.mxu0 0.0
    %565 = vmatpush1.msra.mxu0 0.0
    %566 = vmatprep.subr.mxu0 0.0
    %567 = vmatpush1.msra.mxu0 0.0
    %568 = vmatprep.subr.mxu0 0.0
    %569 = vmatpush1.msra.mxu0 0.0
    %570 = vmatprep.subr.mxu0 0.0
    %571 = vmatpush1.msra.mxu0 0.0
    %572 = vmatprep.mubr.f32.mxu0 0.0
    %573 = vmatmul.mubr.f32.gmra.mrb[0].mxu0 0.0
    %v574 = vpop.f32.mrb[0].mxu0
    %v575 = vadd.f32 0.0, %v574
    %v576 = vpop.f32.mrb[0].mxu0
    %577 = vdwg.mxu0
    %v578 = vadd.f32 %v434, %v504
    %v579 = vmul.f32 %v578, 0.5
    %v580 = vtanh.pop %v579
    %v581 = vadd.f32 %v580, 1.0
    %v582 = vmul.f32 %v581, 0.5
    %v583 = vadd.f32 %v435, %v506
    %v584 = vmul.f32 %v583, 0.5
    %v585 = vtanh.pop %v584
    %v586 = vadd.f32 %v585, 1.0
    %v587 = vmul.f32 %v586, 0.5
    %v589 = vlaneseq
    %v590 = vshrl.u32 %v589, 7
    %v591 = vsub.s32 0, %v590
    %v592 = vrot.slane %v141, %v591
    %v594 = vadd.f32 %v575, %v592
    %v595 = vmul.f32 %v582, %v594
    %v596 = vadd.f32 %v436, %v595
    %v597 = vtanh.pop %v596
    %v598 = vsub.f32 1.0, %v587
    %v599 = vmul.f32 %v598, %v597
    %v600 = vmul.f32 %v587, 0.0
    %v601 = vadd.f32 %v599, %v600
    %vm602 = vcmp.gt.s32.totalorder %v142, 0
    %v603 = vsel %vm602, 1, 0
    %604 = vset.pattern.permute.xlu0 0
    %605 = vperm.xlu0 %604, %v603
    %v606 = vpop.permute.xlu0 %605
    %vm607 = vcmp.eq.s32.totalorder %v606, 1
    %v608 = vsel %vm607, %v601, 0.0
    %609 = vst [vmem:[#allocation9] sm:$0xff] %v608
    %s610 = scalar_lea.vmem [#allocation2], 24
    %v611 = vld [vmem:[%s610] sm:$0xff]
    %v612 = vld [vmem:[%s610 + $0x8] sm:$0xff]
    %v613 = vld [vmem:[%s610 + $0x10] sm:$0xff]
    %614 = vmatprep.subr.mxu0 %v93
    %615 = vmatpush1.msra.mxu0 %v92
    %616 = vmatprep.subr.mxu0 %v96
    %617 = vmatpush1.msra.mxu0 %v95
    %618 = vmatprep.subr.mxu0 %v99
    %619 = vmatpush1.msra.mxu0 %v98
    %620 = vmatprep.subr.mxu0 %v102
    %621 = vmatpush1.msra.mxu0 %v101
    %622 = vmatprep.subr.mxu0 %v105
    %623 = vmatpush1.msra.mxu0 %v104
    %624 = vmatprep.subr.mxu0 %v108
    %625 = vmatpush1.msra.mxu0 %v107
    %626 = vmatprep.subr.mxu0 %v111
    %627 = vmatpush1.msra.mxu0 %v110
    %628 = vmatprep.subr.mxu0 %v114
    %629 = vmatpush1.msra.mxu0 %v113
    %630 = vmatprep.subr.mxu0 %v117
    %631 = vmatpush1.msra.mxu0 %v116
    %632 = vmatprep.subr.mxu0 %v120
    %633 = vmatpush1.msra.mxu0 %v119
    %634 = vmatprep.subr.mxu0 %v123
    %635 = vmatpush1.msra.mxu0 %v122
    %636 = vmatprep.subr.mxu0 %v126
    %637 = vmatpush1.msra.mxu0 %v125
    %638 = vmatprep.subr.mxu0 %v129
    %639 = vmatpush1.msra.mxu0 %v128
    %640 = vmatprep.subr.mxu0 %v132
    %641 = vmatpush1.msra.mxu0 %v131
    %642 = vmatprep.subr.mxu0 %v135
    %643 = vmatpush1.msra.mxu0 %v134
    %644 = vmatprep.subr.mxu0 %v138
    %645 = vmatpush1.msra.mxu0 %v137
    %646 = vmatprep.subr.mxu0 0.0
    %647 = vmatpush1.msra.mxu0 0.0
    %648 = vmatprep.subr.mxu0 0.0
    %649 = vmatpush1.msra.mxu0 0.0
    %650 = vmatprep.subr.mxu0 0.0
    %651 = vmatpush1.msra.mxu0 0.0
    %652 = vmatprep.subr.mxu0 0.0
    %653 = vmatpush1.msra.mxu0 0.0
    %654 = vmatprep.subr.mxu0 0.0
    %655 = vmatpush1.msra.mxu0 0.0
    %656 = vmatprep.subr.mxu0 0.0
    %657 = vmatpush1.msra.mxu0 0.0
    %658 = vmatprep.subr.mxu0 0.0
    %659 = vmatpush1.msra.mxu0 0.0
    %660 = vmatprep.subr.mxu0 0.0
    %661 = vmatpush1.msra.mxu0 0.0
    %662 = vmatprep.subr.mxu0 0.0
    %663 = vmatpush1.msra.mxu0 0.0
    %664 = vmatprep.subr.mxu0 0.0
    %665 = vmatpush1.msra.mxu0 0.0
    %666 = vmatprep.subr.mxu0 0.0
    %667 = vmatpush1.msra.mxu0 0.0
    %668 = vmatprep.subr.mxu0 0.0
    %669 = vmatpush1.msra.mxu0 0.0
    %670 = vmatprep.subr.mxu0 0.0
    %671 = vmatpush1.msra.mxu0 0.0
    %672 = vmatprep.subr.mxu0 0.0
    %673 = vmatpush1.msra.mxu0 0.0
    %674 = vmatprep.subr.mxu0 0.0
    %675 = vmatpush1.msra.mxu0 0.0
    %676 = vmatprep.subr.mxu0 0.0
    %677 = vmatpush1.msra.mxu0 0.0
    %678 = vmatprep.mubr.f32.mxu0 0.0
    %679 = vmatmul.mubr.f32.gmra.mrb[0].mxu0 %v608
    %v680 = vpop.f32.mrb[0].mxu0
    %v681 = vadd.f32 0.0, %v680
    %v682 = vpop.f32.mrb[0].mxu0
    %v683 = vadd.f32 0.0, %v682
    %684 = vdwg.mxu0
    %685 = vmatprep.subr.mxu0 0.0
    %686 = vmatpush1.msra.mxu0 %v94
    %687 = vmatprep.subr.mxu0 0.0
    %688 = vmatpush1.msra.mxu0 %v97
    %689 = vmatprep.subr.mxu0 0.0
    %690 = vmatpush1.msra.mxu0 %v100
    %691 = vmatprep.subr.mxu0 0.0
    %692 = vmatpush1.msra.mxu0 %v103
    %693 = vmatprep.subr.mxu0 0.0
    %694 = vmatpush1.msra.mxu0 %v106
    %695 = vmatprep.subr.mxu0 0.0
    %696 = vmatpush1.msra.mxu0 %v109
    %697 = vmatprep.subr.mxu0 0.0
    %698 = vmatpush1.msra.mxu0 %v112
    %699 = vmatprep.subr.mxu0 0.0
    %700 = vmatpush1.msra.mxu0 %v115
    %701 = vmatprep.subr.mxu0 0.0
    %702 = vmatpush1.msra.mxu0 %v118
    %703 = vmatprep.subr.mxu0 0.0
    %704 = vmatpush1.msra.mxu0 %v121
    %705 = vmatprep.subr.mxu0 0.0
    %706 = vmatpush1.msra.mxu0 %v124
    %707 = vmatprep.subr.mxu0 0.0
    %708 = vmatpush1.msra.mxu0 %v127
    %709 = vmatprep.subr.mxu0 0.0
    %710 = vmatpush1.msra.mxu0 %v130
    %711 = vmatprep.subr.mxu0 0.0
    %712 = vmatpush1.msra.mxu0 %v133
    %713 = vmatprep.subr.mxu0 0.0
    %714 = vmatpush1.msra.mxu0 %v136
    %715 = vmatprep.subr.mxu0 0.0
    %716 = vmatpush1.msra.mxu0 %v139
    %717 = vmatprep.subr.mxu0 0.0
    %718 = vmatpush1.msra.mxu0 0.0
    %719 = vmatprep.subr.mxu0 0.0
    %720 = vmatpush1.msra.mxu0 0.0
    %721 = vmatprep.subr.mxu0 0.0
    %722 = vmatpush1.msra.mxu0 0.0
    %723 = vmatprep.subr.mxu0 0.0
    %724 = vmatpush1.msra.mxu0 0.0
    %725 = vmatprep.subr.mxu0 0.0
    %726 = vmatpush1.msra.mxu0 0.0
    %727 = vmatprep.subr.mxu0 0.0
    %728 = vmatpush1.msra.mxu0 0.0
    %729 = vmatprep.subr.mxu0 0.0
    %730 = vmatpush1.msra.mxu0 0.0
    %731 = vmatprep.subr.mxu0 0.0
    %732 = vmatpush1.msra.mxu0 0.0
    %733 = vmatprep.subr.mxu0 0.0
    %734 = vmatpush1.msra.mxu0 0.0
    %735 = vmatprep.subr.mxu0 0.0
    %736 = vmatpush1.msra.mxu0 0.0
    %737 = vmatprep.subr.mxu0 0.0
    %738 = vmatpush1.msra.mxu0 0.0
    %739 = vmatprep.subr.mxu0 0.0
    %740 = vmatpush1.msra.mxu0 0.0
    %741 = vmatprep.subr.mxu0 0.0
    %742 = vmatpush1.msra.mxu0 0.0
    %743 = vmatprep.subr.mxu0 0.0
    %744 = vmatpush1.msra.mxu0 0.0
    %745 = vmatprep.subr.mxu0 0.0
    %746 = vmatpush1.msra.mxu0 0.0
    %747 = vmatprep.subr.mxu0 0.0
    %748 = vmatpush1.msra.mxu0 0.0
    %749 = vmatprep.mubr.f32.mxu0 0.0
    %750 = vmatmul.mubr.f32.gmra.mrb[0].mxu0 %v608
    %v751 = vpop.f32.mrb[0].mxu0
    %v752 = vadd.f32 0.0, %v751
    %v753 = vpop.f32.mrb[0].mxu0
    %754 = vdwg.mxu0
    %v755 = vadd.f32 %v611, %v681
    %v756 = vmul.f32 %v755, 0.5
    %v757 = vtanh.pop %v756
    %v758 = vadd.f32 %v757, 1.0
    %v759 = vmul.f32 %v758, 0.5
    %v760 = vadd.f32 %v612, %v683
    %v761 = vmul.f32 %v760, 0.5
    %v762 = vtanh.pop %v761
    %v763 = vadd.f32 %v762, 1.0
    %v764 = vmul.f32 %v763, 0.5
    %v765 = vadd.f32 %v752, %v592
    %v766 = vmul.f32 %v759, %v765
    %v767 = vadd.f32 %v613, %v766
    %v768 = vtanh.pop %v767
    %v769 = vsub.f32 1.0, %v764
    %v770 = vmul.f32 %v769, %v768
    %v771 = vmul.f32 %v764, %v608
    %v772 = vadd.f32 %v770, %v771
    %vm773 = vcmp.gt.s32.totalorder %v142, 1
    %v774 = vsel %vm773, 1, 0
    %775 = vset.pattern.permute.xlu0 0
    %776 = vperm.xlu0 %775, %v774
    %v777 = vpop.permute.xlu0 %776
    %vm778 = vcmp.eq.s32.totalorder %v777, 1
    %v779 = vsel %vm778, %v772, 0.0
    %s780 = scalar_lea.vmem [#allocation9], 8
    %781 = vst [vmem:[%s780] sm:$0xff] %v779
    %v782 = vsel %vm778, %v772, %v608
    %s783 = scalar_lea.vmem [#allocation2], 48
    %v784 = vld [vmem:[%s783] sm:$0xff]
    %v785 = vld [vmem:[%s783 + $0x8] sm:$0xff]
    %v786 = vld [vmem:[%s783 + $0x10] sm:$0xff]
    %787 = vmatprep.subr.mxu0 %v93
    %788 = vmatpush1.msra.mxu0 %v92
    %789 = vmatprep.subr.mxu0 %v96
    %790 = vmatpush1.msra.mxu0 %v95
    %791 = vmatprep.subr.mxu0 %v99
    %792 = vmatpush1.msra.mxu0 %v98
    %793 = vmatprep.subr.mxu0 %v102
    %794 = vmatpush1.msra.mxu0 %v101
    %795 = vmatprep.subr.mxu0 %v105
    %796 = vmatpush1.msra.mxu0 %v104
    %797 = vmatprep.subr.mxu0 %v108
    %798 = vmatpush1.msra.mxu0 %v107
    %799 = vmatprep.subr.mxu0 %v111
    %800 = vmatpush1.msra.mxu0 %v110
    %801 = vmatprep.subr.mxu0 %v114
    %802 = vmatpush1.msra.mxu0 %v113
    %803 = vmatprep.subr.mxu0 %v117
    %804 = vmatpush1.msra.mxu0 %v116
    %805 = vmatprep.subr.mxu0 %v120
    %806 = vmatpush1.msra.mxu0 %v119
    %807 = vmatprep.subr.mxu0 %v123
    %808 = vmatpush1.msra.mxu0 %v122
    %809 = vmatprep.subr.mxu0 %v126
    %810 = vmatpush1.msra.mxu0 %v125
    %811 = vmatprep.subr.mxu0 %v129
    %812 = vmatpush1.msra.mxu0 %v128
    %813 = vmatprep.subr.mxu0 %v132
    %814 = vmatpush1.msra.mxu0 %v131
    %815 = vmatprep.subr.mxu0 %v135
    %816 = vmatpush1.msra.mxu0 %v134
    %817 = vmatprep.subr.mxu0 %v138
    %818 = vmatpush1.msra.mxu0 %v137
    %819 = vmatprep.subr.mxu0 0.0
    %820 = vmatpush1.msra.mxu0 0.0
    %821 = vmatprep.subr.mxu0 0.0
    %822 = vmatpush1.msra.mxu0 0.0
    %823 = vmatprep.subr.mxu0 0.0
    %824 = vmatpush1.msra.mxu0 0.0
    %825 = vmatprep.subr.mxu0 0.0
    %826 = vmatpush1.msra.mxu0 0.0
    %827 = vmatprep.subr.mxu0 0.0
    %828 = vmatpush1.msra.mxu0 0.0
    %829 = vmatprep.subr.mxu0 0.0
    %830 = vmatpush1.msra.mxu0 0.0
    %831 = vmatprep.subr.mxu0 0.0
    %832 = vmatpush1.msra.mxu0 0.0
    %833 = vmatprep.subr.mxu0 0.0
    %834 = vmatpush1.msra.mxu0 0.0
    %835 = vmatprep.subr.mxu0 0.0
    %836 = vmatpush1.msra.mxu0 0.0
    %837 = vmatprep.subr.mxu0 0.0
    %838 = vmatpush1.msra.mxu0 0.0
    %839 = vmatprep.subr.mxu0 0.0
    %840 = vmatpush1.msra.mxu0 0.0
    %841 = vmatprep.subr.mxu0 0.0
    %842 = vmatpush1.msra.mxu0 0.0
    %843 = vmatprep.subr.mxu0 0.0
    %844 = vmatpush1.msra.mxu0 0.0
    %845 = vmatprep.subr.mxu0 0.0
    %846 = vmatpush1.msra.mxu0 0.0
    %847 = vmatprep.subr.mxu0 0.0
    %848 = vmatpush1.msra.mxu0 0.0
    %849 = vmatprep.subr.mxu0 0.0
    %850 = vmatpush1.msra.mxu0 0.0
    %851 = vmatprep.mubr.f32.mxu0 0.0
    %852 = vmatmul.mubr.f32.gmra.mrb[0].mxu0 %v782
    %v853 = vpop.f32.mrb[0].mxu0
    %v854 = vadd.f32 0.0, %v853
    %v855 = vpop.f32.mrb[0].mxu0
    %v856 = vadd.f32 0.0, %v855
    %857 = vdwg.mxu0
    %858 = vmatprep.subr.mxu0 0.0
    %859 = vmatpush1.msra.mxu0 %v94
    %860 = vmatprep.subr.mxu0 0.0
    %861 = vmatpush1.msra.mxu0 %v97
    %862 = vmatprep.subr.mxu0 0.0
    %863 = vmatpush1.msra.mxu0 %v100
    %864 = vmatprep.subr.mxu0 0.0
    %865 = vmatpush1.msra.mxu0 %v103
    %866 = vmatprep.subr.mxu0 0.0
    %867 = vmatpush1.msra.mxu0 %v106
    %868 = vmatprep.subr.mxu0 0.0
    %869 = vmatpush1.msra.mxu0 %v109
    %870 = vmatprep.subr.mxu0 0.0
    %871 = vmatpush1.msra.mxu0 %v112
    %872 = vmatprep.subr.mxu0 0.0
    %873 = vmatpush1.msra.mxu0 %v115
    %874 = vmatprep.subr.mxu0 0.0
    %875 = vmatpush1.msra.mxu0 %v118
    %876 = vmatprep.subr.mxu0 0.0
    %877 = vmatpush1.msra.mxu0 %v121
    %878 = vmatprep.subr.mxu0 0.0
    %879 = vmatpush1.msra.mxu0 %v124
    %880 = vmatprep.subr.mxu0 0.0
    %881 = vmatpush1.msra.mxu0 %v127
    %882 = vmatprep.subr.mxu0 0.0
    %883 = vmatpush1.msra.mxu0 %v130
    %884 = vmatprep.subr.mxu0 0.0
    %885 = vmatpush1.msra.mxu0 %v133
    %886 = vmatprep.subr.mxu0 0.0
    %887 = vmatpush1.msra.mxu0 %v136
    %888 = vmatprep.subr.mxu0 0.0
    %889 = vmatpush1.msra.mxu0 %v139
    %890 = vmatprep.subr.mxu0 0.0
    %891 = vmatpush1.msra.mxu0 0.0
    %892 = vmatprep.subr.mxu0 0.0
    %893 = vmatpush1.msra.mxu0 0.0
    %894 = vmatprep.subr.mxu0 0.0
    %895 = vmatpush1.msra.mxu0 0.0
    %896 = vmatprep.subr.mxu0 0.0
    %897 = vmatpush1.msra.mxu0 0.0
    %898 = vmatprep.subr.mxu0 0.0
    %899 = vmatpush1.msra.mxu0 0.0
    %900 = vmatprep.subr.mxu0 0.0
    %901 = vmatpush1.msra.mxu0 0.0
    %902 = vmatprep.subr.mxu0 0.0
    %903 = vmatpush1.msra.mxu0 0.0
    %904 = vmatprep.subr.mxu0 0.0
    %905 = vmatpush1.msra.mxu0 0.0
    %906 = vmatprep.subr.mxu0 0.0
    %907 = vmatpush1.msra.mxu0 0.0
    %908 = vmatprep.subr.mxu0 0.0
    %909 = vmatpush1.msra.mxu0 0.0
    %910 = vmatprep.subr.mxu0 0.0
    %911 = vmatpush1.msra.mxu0 0.0
    %912 = vmatprep.subr.mxu0 0.0
    %913 = vmatpush1.msra.mxu0 0.0
    %914 = vmatprep.subr.mxu0 0.0
    %915 = vmatpush1.msra.mxu0 0.0
    %916 = vmatprep.subr.mxu0 0.0
    %917 = vmatpush1.msra.mxu0 0.0
    %918 = vmatprep.subr.mxu0 0.0
    %919 = vmatpush1.msra.mxu0 0.0
    %920 = vmatprep.subr.mxu0 0.0
    %921 = vmatpush1.msra.mxu0 0.0
    %922 = vmatprep.mubr.f32.mxu0 0.0
    %923 = vmatmul.mubr.f32.gmra.mrb[0].mxu0 %v782
    %v924 = vpop.f32.mrb[0].mxu0
    %v925 = vadd.f32 0.0, %v924
    %v926 = vpop.f32.mrb[0].mxu0
    %927 = vdwg.mxu0
    %v928 = vadd.f32 %v784, %v854
    %v929 = vmul.f32 %v928, 0.5
    %v930 = vtanh.pop %v929
    %v931 = vadd.f32 %v930, 1.0
    %v932 = vmul.f32 %v931, 0.5
    %v933 = vadd.f32 %v785, %v856
    %v934 = vmul.f32 %v933, 0.5
    %v935 = vtanh.pop %v934
    %v936 = vadd.f32 %v935, 1.0
    %v937 = vmul.f32 %v936, 0.5
    %v938 = vadd.f32 %v925, %v592
    %v939 = vmul.f32 %v932, %v938
    %v940 = vadd.f32 %v786, %v939
    %v941 = vtanh.pop %v940
    %v942 = vsub.f32 1.0, %v937
    %v943 = vmul.f32 %v942, %v941
    %v944 = vmul.f32 %v937, %v782
    %v945 = vadd.f32 %v943, %v944
    %vm946 = vcmp.gt.s32.totalorder %v142, 2
    %v947 = vsel %vm946, 1, 0
    %948 = vset.pattern.permute.xlu0 0
    %949 = vperm.xlu0 %948, %v947
    %v950 = vpop.permute.xlu0 %949
    %vm951 = vcmp.eq.s32.totalorder %v950, 1
    %v952 = vsel %vm951, %v945, 0.0
    %s953 = scalar_lea.vmem [#allocation9], 16
    %954 = vst [vmem:[%s953] sm:$0xff] %v952
    %v955 = vsel %vm951, %v945, %v782
    %s956 = scalar_lea.vmem [#allocation2], 72
    %v957 = vld [vmem:[%s956] sm:$0xff]
    %v958 = vld [vmem:[%s956 + $0x8] sm:$0xff]
    %v959 = vld [vmem:[%s956 + $0x10] sm:$0xff]
    %960 = vmatprep.subr.mxu0 %v93
    %961 = vmatpush1.msra.mxu0 %v92
    %962 = vmatprep.subr.mxu0 %v96
    %963 = vmatpush1.msra.mxu0 %v95
    %964 = vmatprep.subr.mxu0 %v99
    %965 = vmatpush1.msra.mxu0 %v98
    %966 = vmatprep.subr.mxu0 %v102
    %967 = vmatpush1.msra.mxu0 %v101
    %968 = vmatprep.subr.mxu0 %v105
    %969 = vmatpush1.msra.mxu0 %v104
    %970 = vmatprep.subr.mxu0 %v108
    %971 = vmatpush1.msra.mxu0 %v107
    %972 = vmatprep.subr.mxu0 %v111
    %973 = vmatpush1.msra.mxu0 %v110
    %974 = vmatprep.subr.mxu0 %v114
    %975 = vmatpush1.msra.mxu0 %v113
    %976 = vmatprep.subr.mxu0 %v117
    %977 = vmatpush1.msra.mxu0 %v116
    %978 = vmatprep.subr.mxu0 %v120
    %979 = vmatpush1.msra.mxu0 %v119
    %980 = vmatprep.subr.mxu0 %v123
    %981 = vmatpush1.msra.mxu0 %v122
    %982 = vmatprep.subr.mxu0 %v126
    %983 = vmatpush1.msra.mxu0 %v125
    %984 = vmatprep.subr.mxu0 %v129
    %985 = vmatpush1.msra.mxu0 %v128
    %986 = vmatprep.subr.mxu0 %v132
    %987 = vmatpush1.msra.mxu0 %v131
    %988 = vmatprep.subr.mxu0 %v135
    %989 = vmatpush1.msra.mxu0 %v134
    %990 = vmatprep.subr.mxu0 %v138
    %991 = vmatpush1.msra.mxu0 %v137
    %992 = vmatprep.subr.mxu0 0.0
    %993 = vmatpush1.msra.mxu0 0.0
    %994 = vmatprep.subr.mxu0 0.0
    %995 = vmatpush1.msra.mxu0 0.0
    %996 = vmatprep.subr.mxu0 0.0
    %997 = vmatpush1.msra.mxu0 0.0
    %998 = vmatprep.subr.mxu0 0.0
    %999 = vmatpush1.msra.mxu0 0.0
    %1000 = vmatprep.subr.mxu0 0.0
    %1001 = vmatpush1.msra.mxu0 0.0
    %1002 = vmatprep.subr.mxu0 0.0
    %1003 = vmatpush1.msra.mxu0 0.0
    %1004 = vmatprep.subr.mxu0 0.0
    %1005 = vmatpush1.msra.mxu0 0.0
    %1006 = vmatprep.subr.mxu0 0.0
    %1007 = vmatpush1.msra.mxu0 0.0
    %1008 = vmatprep.subr.mxu0 0.0
    %1009 = vmatpush1.msra.mxu0 0.0
    %1010 = vmatprep.subr.mxu0 0.0
    %1011 = vmatpush1.msra.mxu0 0.0
    %1012 = vmatprep.subr.mxu0 0.0
    %1013 = vmatpush1.msra.mxu0 0.0
    %1014 = vmatprep.subr.mxu0 0.0
    %1015 = vmatpush1.msra.mxu0 0.0
    %1016 = vmatprep.subr.mxu0 0.0
    %1017 = vmatpush1.msra.mxu0 0.0
    %1018 = vmatprep.subr.mxu0 0.0
    %1019 = vmatpush1.msra.mxu0 0.0
    %1020 = vmatprep.subr.mxu0 0.0
    %1021 = vmatpush1.msra.mxu0 0.0
    %1022 = vmatprep.subr.mxu0 0.0
    %1023 = vmatpush1.msra.mxu0 0.0
    %1024 = vmatprep.mubr.f32.mxu0 0.0
    %1025 = vmatmul.mubr.f32.gmra.mrb[0].mxu0 %v955
    %v1026 = vpop.f32.mrb[0].mxu0
    %v1027 = vadd.f32 0.0, %v1026
    %v1028 = vpop.f32.mrb[0].mxu0
    %v1029 = vadd.f32 0.0, %v1028
    %1030 = vdwg.mxu0
    %1031 = vmatprep.subr.mxu0 0.0
    %1032 = vmatpush1.msra.mxu0 %v94
    %1033 = vmatprep.subr.mxu0 0.0
    %1034 = vmatpush1.msra.mxu0 %v97
    %1035 = vmatprep.subr.mxu0 0.0
    %1036 = vmatpush1.msra.mxu0 %v100
    %1037 = vmatprep.subr.mxu0 0.0
    %1038 = vmatpush1.msra.mxu0 %v103
    %1039 = vmatprep.subr.mxu0 0.0
    %1040 = vmatpush1.msra.mxu0 %v106
    %1041 = vmatprep.subr.mxu0 0.0
    %1042 = vmatpush1.msra.mxu0 %v109
    %1043 = vmatprep.subr.mxu0 0.0
    %1044 = vmatpush1.msra.mxu0 %v112
    %1045 = vmatprep.subr.mxu0 0.0
    %1046 = vmatpush1.msra.mxu0 %v115
    %1047 = vmatprep.subr.mxu0 0.0
    %1048 = vmatpush1.msra.mxu0 %v118
    %1049 = vmatprep.subr.mxu0 0.0
    %1050 = vmatpush1.msra.mxu0 %v121
    %1051 = vmatprep.subr.mxu0 0.0
    %1052 = vmatpush1.msra.mxu0 %v124
    %1053 = vmatprep.subr.mxu0 0.0
    %1054 = vmatpush1.msra.mxu0 %v127
    %1055 = vmatprep.subr.mxu0 0.0
    %1056 = vmatpush1.msra.mxu0 %v130
    %1057 = vmatprep.subr.mxu0 0.0
    %1058 = vmatpush1.msra.mxu0 %v133
    %1059 = vmatprep.subr.mxu0 0.0
    %1060 = vmatpush1.msra.mxu0 %v136
    %1061 = vmatprep.subr.mxu0 0.0
    %1062 = vmatpush1.msra.mxu0 %v139
    %1063 = vmatprep.subr.mxu0 0.0
    %1064 = vmatpush1.msra.mxu0 0.0
    %1065 = vmatprep.subr.mxu0 0.0
    %1066 = vmatpush1.msra.mxu0 0.0
    %1067 = vmatprep.subr.mxu0 0.0
    %1068 = vmatpush1.msra.mxu0 0.0
    %1069 = vmatprep.subr.mxu0 0.0
    %1070 = vmatpush1.msra.mxu0 0.0
    %1071 = vmatprep.subr.mxu0 0.0
    %1072 = vmatpush1.msra.mxu0 0.0
    %1073 = vmatprep.subr.mxu0 0.0
    %1074 = vmatpush1.msra.mxu0 0.0
    %1075 = vmatprep.subr.mxu0 0.0
    %1076 = vmatpush1.msra.mxu0 0.0
    %1077 = vmatprep.subr.mxu0 0.0
    %1078 = vmatpush1.msra.mxu0 0.0
    %1079 = vmatprep.subr.mxu0 0.0
    %1080 = vmatpush1.msra.mxu0 0.0
    %1081 = vmatprep.subr.mxu0 0.0
    %1082 = vmatpush1.msra.mxu0 0.0
    %1083 = vmatprep.subr.mxu0 0.0
    %1084 = vmatpush1.msra.mxu0 0.0
    %1085 = vmatprep.subr.mxu0 0.0
    %1086 = vmatpush1.msra.mxu0 0.0
    %1087 = vmatprep.subr.mxu0 0.0
    %1088 = vmatpush1.msra.mxu0 0.0
    %1089 = vmatprep.subr.mxu0 0.0
    %1090 = vmatpush1.msra.mxu0 0.0
    %1091 = vmatprep.subr.mxu0 0.0
    %1092 = vmatpush1.msra.mxu0 0.0
    %1093 = vmatprep.subr.mxu0 0.0
    %1094 = vmatpush1.msra.mxu0 0.0
    %1095 = vmatprep.mubr.f32.mxu0 0.0
    %1096 = vmatmul.mubr.f32.gmra.mrb[0].mxu0 %v955
    %v1097 = vpop.f32.mrb[0].mxu0
    %v1098 = vadd.f32 0.0, %v1097
    %v1099 = vpop.f32.mrb[0].mxu0
    %1100 = vdwg.mxu0
    %v1101 = vadd.f32 %v957, %v1027
    %v1102 = vmul.f32 %v1101, 0.5
    %v1103 = vtanh.pop %v1102
    %v1104 = vadd.f32 %v1103, 1.0
    %v1105 = vmul.f32 %v1104, 0.5
    %v1106 = vadd.f32 %v958, %v1029
    %v1107 = vmul.f32 %v1106, 0.5
    %v1108 = vtanh.pop %v1107
    %v1109 = vadd.f32 %v1108, 1.0
    %v1110 = vmul.f32 %v1109, 0.5
    %v1111 = vadd.f32 %v1098, %v592
    %v1112 = vmul.f32 %v1105, %v1111
    %v1113 = vadd.f32 %v959, %v1112
    %v1114 = vtanh.pop %v1113
    %v1115 = vsub.f32 1.0, %v1110
    %v1116 = vmul.f32 %v1115, %v1114
    %v1117 = vmul.f32 %v1110, %v955
    %v1118 = vadd.f32 %v1116, %v1117
    %vm1119 = vcmp.gt.s32.totalorder %v142, 3
    %v1120 = vsel %vm1119, 1, 0
    %1121 = vset.pattern.permute.xlu0 0
    %1122 = vperm.xlu0 %1121, %v1120
    %v1123 = vpop.permute.xlu0 %1122
    %vm1124 = vcmp.eq.s32.totalorder %v1123, 1
    %v1125 = vsel %vm1124, %v1118, 0.0
    %s1126 = scalar_lea.vmem [#allocation9], 24
    %1127 = vst [vmem:[%s1126] sm:$0xff] %v1125
    %v1128 = vsel %vm1124, %v1118, %v955
    %s1129 = scalar_lea.vmem [#allocation2], 96
    %v1130 = vld [vmem:[%s1129] sm:$0xff]
    %v1131 = vld [vmem:[%s1129 + $0x8] sm:$0xff]
    %v1132 = vld [vmem:[%s1129 + $0x10] sm:$0xff]
    %1133 = vmatprep.subr.mxu0 %v93
    %1134 = vmatpush1.msra.mxu0 %v92
    %1135 = vmatprep.subr.mxu0 %v96
    %1136 = vmatpush1.msra.mxu0 %v95
    %1137 = vmatprep.subr.mxu0 %v99
    %1138 = vmatpush1.msra.mxu0 %v98
    %1139 = vmatprep.subr.mxu0 %v102
    %1140 = vmatpush1.msra.mxu0 %v101
    %1141 = vmatprep.subr.mxu0 %v105
    %1142 = vmatpush1.msra.mxu0 %v104
    %1143 = vmatprep.subr.mxu0 %v108
    %1144 = vmatpush1.msra.mxu0 %v107
    %1145 = vmatprep.subr.mxu0 %v111
    %1146 = vmatpush1.msra.mxu0 %v110
    %1147 = vmatprep.subr.mxu0 %v114
    %1148 = vmatpush1.msra.mxu0 %v113
    %1149 = vmatprep.subr.mxu0 %v117
    %1150 = vmatpush1.msra.mxu0 %v116
    %1151 = vmatprep.subr.mxu0 %v120
    %1152 = vmatpush1.msra.mxu0 %v119
    %1153 = vmatprep.subr.mxu0 %v123
    %1154 = vmatpush1.msra.mxu0 %v122
    %1155 = vmatprep.subr.mxu0 %v126
    %1156 = vmatpush1.msra.mxu0 %v125
    %1157 = vmatprep.subr.mxu0 %v129
    %1158 = vmatpush1.msra.mxu0 %v128
    %1159 = vmatprep.subr.mxu0 %v132
    %1160 = vmatpush1.msra.mxu0 %v131
    %1161 = vmatprep.subr.mxu0 %v135
    %1162 = vmatpush1.msra.mxu0 %v134
    %1163 = vmatprep.subr.mxu0 %v138
    %1164 = vmatpush1.msra.mxu0 %v137
    %1165 = vmatprep.subr.mxu0 0.0
    %1166 = vmatpush1.msra.mxu0 0.0
    %1167 = vmatprep.subr.mxu0 0.0
    %1168 = vmatpush1.msra.mxu0 0.0
    %1169 = vmatprep.subr.mxu0 0.0
    %1170 = vmatpush1.msra.mxu0 0.0
    %1171 = vmatprep.subr.mxu0 0.0
    %1172 = vmatpush1.msra.mxu0 0.0
    %1173 = vmatprep.subr.mxu0 0.0
    %1174 = vmatpush1.msra.mxu0 0.0
    %1175 = vmatprep.subr.mxu0 0.0
    %1176 = vmatpush1.msra.mxu0 0.0
    %1177 = vmatprep.subr.mxu0 0.0
    %1178 = vmatpush1.msra.mxu0 0.0
    %1179 = vmatprep.subr.mxu0 0.0
    %1180 = vmatpush1.msra.mxu0 0.0
    %1181 = vmatprep.subr.mxu0 0.0
    %1182 = vmatpush1.msra.mxu0 0.0
    %1183 = vmatprep.subr.mxu0 0.0
    %1184 = vmatpush1.msra.mxu0 0.0
    %1185 = vmatprep.subr.mxu0 0.0
    %1186 = vmatpush1.msra.mxu0 0.0
    %1187 = vmatprep.subr.mxu0 0.0
    %1188 = vmatpush1.msra.mxu0 0.0
    %1189 = vmatprep.subr.mxu0 0.0
    %1190 = vmatpush1.msra.mxu0 0.0
    %1191 = vmatprep.subr.mxu0 0.0
    %1192 = vmatpush1.msra.mxu0 0.0
    %1193 = vmatprep.subr.mxu0 0.0
    %1194 = vmatpush1.msra.mxu0 0.0
    %1195 = vmatprep.subr.mxu0 0.0
    %1196 = vmatpush1.msra.mxu0 0.0
    %1197 = vmatprep.mubr.f32.mxu0 0.0
    %1198 = vmatmul.mubr.f32.gmra.mrb[0].mxu0 %v1128
    %v1199 = vpop.f32.mrb[0].mxu0
    %v1200 = vadd.f32 0.0, %v1199
    %v1201 = vpop.f32.mrb[0].mxu0
    %v1202 = vadd.f32 0.0, %v1201
    %1203 = vdwg.mxu0
    %1204 = vmatprep.subr.mxu0 0.0
    %1205 = vmatpush1.msra.mxu0 %v94
    %1206 = vmatprep.subr.mxu0 0.0
    %1207 = vmatpush1.msra.mxu0 %v97
    %1208 = vmatprep.subr.mxu0 0.0
    %1209 = vmatpush1.msra.mxu0 %v100
    %1210 = vmatprep.subr.mxu0 0.0
    %1211 = vmatpush1.msra.mxu0 %v103
    %1212 = vmatprep.subr.mxu0 0.0
    %1213 = vmatpush1.msra.mxu0 %v106
    %1214 = vmatprep.subr.mxu0 0.0
    %1215 = vmatpush1.msra.mxu0 %v109
    %1216 = vmatprep.subr.mxu0 0.0
    %1217 = vmatpush1.msra.mxu0 %v112
    %1218 = vmatprep.subr.mxu0 0.0
    %1219 = vmatpush1.msra.mxu0 %v115
    %1220 = vmatprep.subr.mxu0 0.0
    %1221 = vmatpush1.msra.mxu0 %v118
    %1222 = vmatprep.subr.mxu0 0.0
    %1223 = vmatpush1.msra.mxu0 %v121
    %1224 = vmatprep.subr.mxu0 0.0
    %1225 = vmatpush1.msra.mxu0 %v124
    %1226 = vmatprep.subr.mxu0 0.0
    %1227 = vmatpush1.msra.mxu0 %v127
    %1228 = vmatprep.subr.mxu0 0.0
    %1229 = vmatpush1.msra.mxu0 %v130
    %1230 = vmatprep.subr.mxu0 0.0
    %1231 = vmatpush1.msra.mxu0 %v133
    %1232 = vmatprep.subr.mxu0 0.0
    %1233 = vmatpush1.msra.mxu0 %v136
    %1234 = vmatprep.subr.mxu0 0.0
    %1235 = vmatpush1.msra.mxu0 %v139
    %1236 = vmatprep.subr.mxu0 0.0
    %1237 = vmatpush1.msra.mxu0 0.0
    %1238 = vmatprep.subr.mxu0 0.0
    %1239 = vmatpush1.msra.mxu0 0.0
    %1240 = vmatprep.subr.mxu0 0.0
    %1241 = vmatpush1.msra.mxu0 0.0
    %1242 = vmatprep.subr.mxu0 0.0
    %1243 = vmatpush1.msra.mxu0 0.0
    %1244 = vmatprep.subr.mxu0 0.0
    %1245 = vmatpush1.msra.mxu0 0.0
    %1246 = vmatprep.subr.mxu0 0.0
    %1247 = vmatpush1.msra.mxu0 0.0
    %1248 = vmatprep.subr.mxu0 0.0
    %1249 = vmatpush1.msra.mxu0 0.0
    %1250 = vmatprep.subr.mxu0 0.0
    %1251 = vmatpush1.msra.mxu0 0.0
    %1252 = vmatprep.subr.mxu0 0.0
    %1253 = vmatpush1.msra.mxu0 0.0
    %1254 = vmatprep.subr.mxu0 0.0
    %1255 = vmatpush1.msra.mxu0 0.0
    %1256 = vmatprep.subr.mxu0 0.0
    %1257 = vmatpush1.msra.mxu0 0.0
    %1258 = vmatprep.subr.mxu0 0.0
    %1259 = vmatpush1.msra.mxu0 0.0
    %1260 = vmatprep.subr.mxu0 0.0
    %1261 = vmatpush1.msra.mxu0 0.0
    %1262 = vmatprep.subr.mxu0 0.0
    %1263 = vmatpush1.msra.mxu0 0.0
    %1264 = vmatprep.subr.mxu0 0.0
    %1265 = vmatpush1.msra.mxu0 0.0
    %1266 = vmatprep.subr.mxu0 0.0
    %1267 = vmatpush1.msra.mxu0 0.0
    %1268 = vmatprep.mubr.f32.mxu0 0.0
    %1269 = vmatmul.mubr.f32.gmra.mrb[0].mxu0 %v1128
    %v1270 = vpop.f32.mrb[0].mxu0
    %v1271 = vadd.f32 0.0, %v1270
    %v1272 = vpop.f32.mrb[0].mxu0
    %1273 = vdwg.mxu0
    %v1274 = vadd.f32 %v1130, %v1200
    %v1275 = vmul.f32 %v1274, 0.5
    %v1276 = vtanh.pop %v1275
    %v1277 = vadd.f32 %v1276, 1.0
    %v1278 = vmul.f32 %v1277, 0.5
    %v1279 = vadd.f32 %v1131, %v1202
    %v1280 = vmul.f32 %v1279, 0.5
    %v1281 = vtanh.pop %v1280
    %v1282 = vadd.f32 %v1281, 1.0
    %v1283 = vmul.f32 %v1282, 0.5
    %v1284 = vadd.f32 %v1271, %v592
    %v1285 = vmul.f32 %v1278, %v1284
    %v1286 = vadd.f32 %v1132, %v1285
    %v1287 = vtanh.pop %v1286
    %v1288 = vsub.f32 1.0, %v1283
    %v1289 = vmul.f32 %v1288, %v1287
    %v1290 = vmul.f32 %v1283, %v1128
    %v1291 = vadd.f32 %v1289, %v1290
    %vm1292 = vcmp.gt.s32.totalorder %v142, 4
    %v1293 = vsel %vm1292, 1, 0
    %1294 = vset.pattern.permute.xlu0 0
    %1295 = vperm.xlu0 %1294, %v1293
    %v1296 = vpop.permute.xlu0 %1295
    %vm1297 = vcmp.eq.s32.totalorder %v1296, 1
    %v1298 = vsel %vm1297, %v1291, 0.0
    %s1299 = scalar_lea.vmem [#allocation9], 32
    %1300 = vst [vmem:[%s1299] sm:$0xff] %v1298
    %v1301 = vsel %vm1297, %v1291, %v1128
    %s1302 = scalar_lea.vmem [#allocation2], 120
    %v1303 = vld [vmem:[%s1302] sm:$0xff]
    %v1304 = vld [vmem:[%s1302 + $0x8] sm:$0xff]
    %v1305 = vld [vmem:[%s1302 + $0x10] sm:$0xff]
    %1306 = vmatprep.subr.mxu0 %v93
    %1307 = vmatpush1.msra.mxu0 %v92
    %1308 = vmatprep.subr.mxu0 %v96
    %1309 = vmatpush1.msra.mxu0 %v95
    %1310 = vmatprep.subr.mxu0 %v99
    %1311 = vmatpush1.msra.mxu0 %v98
    %1312 = vmatprep.subr.mxu0 %v102
    %1313 = vmatpush1.msra.mxu0 %v101
    %1314 = vmatprep.subr.mxu0 %v105
    %1315 = vmatpush1.msra.mxu0 %v104
    %1316 = vmatprep.subr.mxu0 %v108
    %1317 = vmatpush1.msra.mxu0 %v107
    %1318 = vmatprep.subr.mxu0 %v111
    %1319 = vmatpush1.msra.mxu0 %v110
    %1320 = vmatprep.subr.mxu0 %v114
    %1321 = vmatpush1.msra.mxu0 %v113
    %1322 = vmatprep.subr.mxu0 %v117
    %1323 = vmatpush1.msra.mxu0 %v116
    %1324 = vmatprep.subr.mxu0 %v120
    %1325 = vmatpush1.msra.mxu0 %v119
    %1326 = vmatprep.subr.mxu0 %v123
    %1327 = vmatpush1.msra.mxu0 %v122
    %1328 = vmatprep.subr.mxu0 %v126
    %1329 = vmatpush1.msra.mxu0 %v125
    %1330 = vmatprep.subr.mxu0 %v129
    %1331 = vmatpush1.msra.mxu0 %v128
    %1332 = vmatprep.subr.mxu0 %v132
    %1333 = vmatpush1.msra.mxu0 %v131
    %1334 = vmatprep.subr.mxu0 %v135
    %1335 = vmatpush1.msra.mxu0 %v134
    %1336 = vmatprep.subr.mxu0 %v138
    %1337 = vmatpush1.msra.mxu0 %v137
    %1338 = vmatprep.subr.mxu0 0.0
    %1339 = vmatpush1.msra.mxu0 0.0
    %1340 = vmatprep.subr.mxu0 0.0
    %1341 = vmatpush1.msra.mxu0 0.0
    %1342 = vmatprep.subr.mxu0 0.0
    %1343 = vmatpush1.msra.mxu0 0.0
    %1344 = vmatprep.subr.mxu0 0.0
    %1345 = vmatpush1.msra.mxu0 0.0
    %1346 = vmatprep.subr.mxu0 0.0
    %1347 = vmatpush1.msra.mxu0 0.0
    %1348 = vmatprep.subr.mxu0 0.0
    %1349 = vmatpush1.msra.mxu0 0.0
    %1350 = vmatprep.subr.mxu0 0.0
    %1351 = vmatpush1.msra.mxu0 0.0
    %1352 = vmatprep.subr.mxu0 0.0
    %1353 = vmatpush1.msra.mxu0 0.0
    %1354 = vmatprep.subr.mxu0 0.0
    %1355 = vmatpush1.msra.mxu0 0.0
    %1356 = vmatprep.subr.mxu0 0.0
    %1357 = vmatpush1.msra.mxu0 0.0
    %1358 = vmatprep.subr.mxu0 0.0
    %1359 = vmatpush1.msra.mxu0 0.0
    %1360 = vmatprep.subr.mxu0 0.0
    %1361 = vmatpush1.msra.mxu0 0.0
    %1362 = vmatprep.subr.mxu0 0.0
    %1363 = vmatpush1.msra.mxu0 0.0
    %1364 = vmatprep.subr.mxu0 0.0
    %1365 = vmatpush1.msra.mxu0 0.0
    %1366 = vmatprep.subr.mxu0 0.0
    %1367 = vmatpush1.msra.mxu0 0.0
    %1368 = vmatprep.subr.mxu0 0.0
    %1369 = vmatpush1.msra.mxu0 0.0
    %1370 = vmatprep.mubr.f32.mxu0 0.0
    %1371 = vmatmul.mubr.f32.gmra.mrb[0].mxu0 %v1301
    %v1372 = vpop.f32.mrb[0].mxu0
    %v1373 = vadd.f32 0.0, %v1372
    %v1374 = vpop.f32.mrb[0].mxu0
    %v1375 = vadd.f32 0.0, %v1374
    %1376 = vdwg.mxu0
    %1377 = vmatprep.subr.mxu0 0.0
    %1378 = vmatpush1.msra.mxu0 %v94
    %1379 = vmatprep.subr.mxu0 0.0
    %1380 = vmatpush1.msra.mxu0 %v97
    %1381 = vmatprep.subr.mxu0 0.0
    %1382 = vmatpush1.msra.mxu0 %v100
    %1383 = vmatprep.subr.mxu0 0.0
    %1384 = vmatpush1.msra.mxu0 %v103
    %1385 = vmatprep.subr.mxu0 0.0
    %1386 = vmatpush1.msra.mxu0 %v106
    %1387 = vmatprep.subr.mxu0 0.0
    %1388 = vmatpush1.msra.mxu0 %v109
    %1389 = vmatprep.subr.mxu0 0.0
    %1390 = vmatpush1.msra.mxu0 %v112
    %1391 = vmatprep.subr.mxu0 0.0
    %1392 = vmatpush1.msra.mxu0 %v115
    %1393 = vmatprep.subr.mxu0 0.0
    %1394 = vmatpush1.msra.mxu0 %v118
    %1395 = vmatprep.subr.mxu0 0.0
    %1396 = vmatpush1.msra.mxu0 %v121
    %1397 = vmatprep.subr.mxu0 0.0
    %1398 = vmatpush1.msra.mxu0 %v124
    %1399 = vmatprep.subr.mxu0 0.0
    %1400 = vmatpush1.msra.mxu0 %v127
    %1401 = vmatprep.subr.mxu0 0.0
    %1402 = vmatpush1.msra.mxu0 %v130
    %1403 = vmatprep.subr.mxu0 0.0
    %1404 = vmatpush1.msra.mxu0 %v133
    %1405 = vmatprep.subr.mxu0 0.0
    %1406 = vmatpush1.msra.mxu0 %v136
    %1407 = vmatprep.subr.mxu0 0.0
    %1408 = vmatpush1.msra.mxu0 %v139
    %1409 = vmatprep.subr.mxu0 0.0
    %1410 = vmatpush1.msra.mxu0 0.0
    %1411 = vmatprep.subr.mxu0 0.0
    %1412 = vmatpush1.msra.mxu0 0.0
    %1413 = vmatprep.subr.mxu0 0.0
    %1414 = vmatpush1.msra.mxu0 0.0
    %1415 = vmatprep.subr.mxu0 0.0
    %1416 = vmatpush1.msra.mxu0 0.0
    %1417 = vmatprep.subr.mxu0 0.0
    %1418 = vmatpush1.msra.mxu0 0.0
    %1419 = vmatprep.subr.mxu0 0.0
    %1420 = vmatpush1.msra.mxu0 0.0
    %1421 = vmatprep.subr.mxu0 0.0
    %1422 = vmatpush1.msra.mxu0 0.0
    %1423 = vmatprep.subr.mxu0 0.0
    %1424 = vmatpush1.msra.mxu0 0.0
    %1425 = vmatprep.subr.mxu0 0.0
    %1426 = vmatpush1.msra.mxu0 0.0
    %1427 = vmatprep.subr.mxu0 0.0
    %1428 = vmatpush1.msra.mxu0 0.0
    %1429 = vmatprep.subr.mxu0 0.0
    %1430 = vmatpush1.msra.mxu0 0.0
    %1431 = vmatprep.subr.mxu0 0.0
    %1432 = vmatpush1.msra.mxu0 0.0
    %1433 = vmatprep.subr.mxu0 0.0
    %1434 = vmatpush1.msra.mxu0 0.0
    %1435 = vmatprep.subr.mxu0 0.0
    %1436 = vmatpush1.msra.mxu0 0.0
    %1437 = vmatprep.subr.mxu0 0.0
    %1438 = vmatpush1.msra.mxu0 0.0
    %1439 = vmatprep.subr.mxu0 0.0
    %1440 = vmatpush1.msra.mxu0 0.0
    %1441 = vmatprep.mubr.f32.mxu0 0.0
    %1442 = vmatmul.mubr.f32.gmra.mrb[0].mxu0 %v1301
    %v1443 = vpop.f32.mrb[0].mxu0
    %v1444 = vadd.f32 0.0, %v1443
    %v1445 = vpop.f32.mrb[0].mxu0
    %1446 = vdwg.mxu0
    %v1447 = vadd.f32 %v1303, %v1373
    %v1448 = vmul.f32 %v1447, 0.5
    %v1449 = vtanh.pop %v1448
    %v1450 = vadd.f32 %v1449, 1.0
    %v1451 = vmul.f32 %v1450, 0.5
    %v1452 = vadd.f32 %v1304, %v1375
    %v1453 = vmul.f32 %v1452, 0.5
    %v1454 = vtanh.pop %v1453
    %v1455 = vadd.f32 %v1454, 1.0
    %v1456 = vmul.f32 %v1455, 0.5
    %v1457 = vadd.f32 %v1444, %v592
    %v1458 = vmul.f32 %v1451, %v1457
    %v1459 = vadd.f32 %v1305, %v1458
    %v1460 = vtanh.pop %v1459
    %v1461 = vsub.f32 1.0, %v1456
    %v1462 = vmul.f32 %v1461, %v1460
    %v1463 = vmul.f32 %v1456, %v1301
    %v1464 = vadd.f32 %v1462, %v1463
    %vm1465 = vcmp.gt.s32.totalorder %v142, 5
    %v1466 = vsel %vm1465, 1, 0
    %1467 = vset.pattern.permute.xlu0 0
    %1468 = vperm.xlu0 %1467, %v1466
    %v1469 = vpop.permute.xlu0 %1468
    %vm1470 = vcmp.eq.s32.totalorder %v1469, 1
    %v1471 = vsel %vm1470, %v1464, 0.0
    %s1472 = scalar_lea.vmem [#allocation9], 40
    %1473 = vst [vmem:[%s1472] sm:$0xff] %v1471
    %v1474 = vsel %vm1470, %v1464, %v1301
    %s1475 = scalar_lea.vmem [#allocation2], 144
    %v1476 = vld [vmem:[%s1475] sm:$0xff]
    %v1477 = vld [vmem:[%s1475 + $0x8] sm:$0xff]
    %v1478 = vld [vmem:[%s1475 + $0x10] sm:$0xff]
    %1479 = vmatprep.subr.mxu0 %v93
    %1480 = vmatpush1.msra.mxu0 %v92
    %1481 = vmatprep.subr.mxu0 %v96
    %1482 = vmatpush1.msra.mxu0 %v95
    %1483 = vmatprep.subr.mxu0 %v99
    %1484 = vmatpush1.msra.mxu0 %v98
    %1485 = vmatprep.subr.mxu0 %v102
    %1486 = vmatpush1.msra.mxu0 %v101
    %1487 = vmatprep.subr.mxu0 %v105
    %1488 = vmatpush1.msra.mxu0 %v104
    %1489 = vmatprep.subr.mxu0 %v108
    %1490 = vmatpush1.msra.mxu0 %v107
    %1491 = vmatprep.subr.mxu0 %v111
    %1492 = vmatpush1.msra.mxu0 %v110
    %1493 = vmatprep.subr.mxu0 %v114
    %1494 = vmatpush1.msra.mxu0 %v113
    %1495 = vmatprep.subr.mxu0 %v117
    %1496 = vmatpush1.msra.mxu0 %v116
    %1497 = vmatprep.subr.mxu0 %v120
    %1498 = vmatpush1.msra.mxu0 %v119
    %1499 = vmatprep.subr.mxu0 %v123
    %1500 = vmatpush1.msra.mxu0 %v122
    %1501 = vmatprep.subr.mxu0 %v126
    %1502 = vmatpush1.msra.mxu0 %v125
    %1503 = vmatprep.subr.mxu0 %v129
    %1504 = vmatpush1.msra.mxu0 %v128
    %1505 = vmatprep.subr.mxu0 %v132
    %1506 = vmatpush1.msra.mxu0 %v131
    %1507 = vmatprep.subr.mxu0 %v135
    %1508 = vmatpush1.msra.mxu0 %v134
    %1509 = vmatprep.subr.mxu0 %v138
    %1510 = vmatpush1.msra.mxu0 %v137
    %1511 = vmatprep.subr.mxu0 0.0
    %1512 = vmatpush1.msra.mxu0 0.0
    %1513 = vmatprep.subr.mxu0 0.0
    %1514 = vmatpush1.msra.mxu0 0.0
    %1515 = vmatprep.subr.mxu0 0.0
    %1516 = vmatpush1.msra.mxu0 0.0
    %1517 = vmatprep.subr.mxu0 0.0
    %1518 = vmatpush1.msra.mxu0 0.0
    %1519 = vmatprep.subr.mxu0 0.0
    %1520 = vmatpush1.msra.mxu0 0.0
    %1521 = vmatprep.subr.mxu0 0.0
    %1522 = vmatpush1.msra.mxu0 0.0
    %1523 = vmatprep.subr.mxu0 0.0
    %1524 = vmatpush1.msra.mxu0 0.0
    %1525 = vmatprep.subr.mxu0 0.0
    %1526 = vmatpush1.msra.mxu0 0.0
    %1527 = vmatprep.subr.mxu0 0.0
    %1528 = vmatpush1.msra.mxu0 0.0
    %1529 = vmatprep.subr.mxu0 0.0
    %1530 = vmatpush1.msra.mxu0 0.0
    %1531 = vmatprep.subr.mxu0 0.0
    %1532 = vmatpush1.msra.mxu0 0.0
    %1533 = vmatprep.subr.mxu0 0.0
    %1534 = vmatpush1.msra.mxu0 0.0
    %1535 = vmatprep.subr.mxu0 0.0
    %1536 = vmatpush1.msra.mxu0 0.0
    %1537 = vmatprep.subr.mxu0 0.0
    %1538 = vmatpush1.msra.mxu0 0.0
    %1539 = vmatprep.subr.mxu0 0.0
    %1540 = vmatpush1.msra.mxu0 0.0
    %1541 = vmatprep.subr.mxu0 0.0
    %1542 = vmatpush1.msra.mxu0 0.0
    %1543 = vmatprep.mubr.f32.mxu0 0.0
    %1544 = vmatmul.mubr.f32.gmra.mrb[0].mxu0 %v1474
    %v1545 = vpop.f32.mrb[0].mxu0
    %v1546 = vadd.f32 0.0, %v1545
    %v1547 = vpop.f32.mrb[0].mxu0
    %v1548 = vadd.f32 0.0, %v1547
    %1549 = vdwg.mxu0
    %1550 = vmatprep.subr.mxu0 0.0
    %1551 = vmatpush1.msra.mxu0 %v94
    %1552 = vmatprep.subr.mxu0 0.0
    %1553 = vmatpush1.msra.mxu0 %v97
    %1554 = vmatprep.subr.mxu0 0.0
    %1555 = vmatpush1.msra.mxu0 %v100
    %1556 = vmatprep.subr.mxu0 0.0
    %1557 = vmatpush1.msra.mxu0 %v103
    %1558 = vmatprep.subr.mxu0 0.0
    %1559 = vmatpush1.msra.mxu0 %v106
    %1560 = vmatprep.subr.mxu0 0.0
    %1561 = vmatpush1.msra.mxu0 %v109
    %1562 = vmatprep.subr.mxu0 0.0
    %1563 = vmatpush1.msra.mxu0 %v112
    %1564 = vmatprep.subr.mxu0 0.0
    %1565 = vmatpush1.msra.mxu0 %v115
    %1566 = vmatprep.subr.mxu0 0.0
    %1567 = vmatpush1.msra.mxu0 %v118
    %1568 = vmatprep.subr.mxu0 0.0
    %1569 = vmatpush1.msra.mxu0 %v121
    %1570 = vmatprep.subr.mxu0 0.0
    %1571 = vmatpush1.msra.mxu0 %v124
    %1572 = vmatprep.subr.mxu0 0.0
    %1573 = vmatpush1.msra.mxu0 %v127
    %1574 = vmatprep.subr.mxu0 0.0
    %1575 = vmatpush1.msra.mxu0 %v130
    %1576 = vmatprep.subr.mxu0 0.0
    %1577 = vmatpush1.msra.mxu0 %v133
    %1578 = vmatprep.subr.mxu0 0.0
    %1579 = vmatpush1.msra.mxu0 %v136
    %1580 = vmatprep.subr.mxu0 0.0
    %1581 = vmatpush1.msra.mxu0 %v139
    %1582 = vmatprep.subr.mxu0 0.0
    %1583 = vmatpush1.msra.mxu0 0.0
    %1584 = vmatprep.subr.mxu0 0.0
    %1585 = vmatpush1.msra.mxu0 0.0
    %1586 = vmatprep.subr.mxu0 0.0
    %1587 = vmatpush1.msra.mxu0 0.0
    %1588 = vmatprep.subr.mxu0 0.0
    %1589 = vmatpush1.msra.mxu0 0.0
    %1590 = vmatprep.subr.mxu0 0.0
    %1591 = vmatpush1.msra.mxu0 0.0
    %1592 = vmatprep.subr.mxu0 0.0
    %1593 = vmatpush1.msra.mxu0 0.0
    %1594 = vmatprep.subr.mxu0 0.0
    %1595 = vmatpush1.msra.mxu0 0.0
    %1596 = vmatprep.subr.mxu0 0.0
    %1597 = vmatpush1.msra.mxu0 0.0
    %1598 = vmatprep.subr.mxu0 0.0
    %1599 = vmatpush1.msra.mxu0 0.0
    %1600 = vmatprep.subr.mxu0 0.0
    %1601 = vmatpush1.msra.mxu0 0.0
    %1602 = vmatprep.subr.mxu0 0.0
    %1603 = vmatpush1.msra.mxu0 0.0
    %1604 = vmatprep.subr.mxu0 0.0
    %1605 = vmatpush1.msra.mxu0 0.0
    %1606 = vmatprep.subr.mxu0 0.0
    %1607 = vmatpush1.msra.mxu0 0.0
    %1608 = vmatprep.subr.mxu0 0.0
    %1609 = vmatpush1.msra.mxu0 0.0
    %1610 = vmatprep.subr.mxu0 0.0
    %1611 = vmatpush1.msra.mxu0 0.0
    %1612 = vmatprep.subr.mxu0 0.0
    %1613 = vmatpush1.msra.mxu0 0.0
    %1614 = vmatprep.mubr.f32.mxu0 0.0
    %1615 = vmatmul.mubr.f32.gmra.mrb[0].mxu0 %v1474
    %v1616 = vpop.f32.mrb[0].mxu0
    %v1617 = vadd.f32 0.0, %v1616
    %v1618 = vpop.f32.mrb[0].mxu0
    %1619 = vdwg.mxu0
    %v1620 = vadd.f32 %v1476, %v1546
    %v1621 = vmul.f32 %v1620, 0.5
    %v1622 = vtanh.pop %v1621
    %v1623 = vadd.f32 %v1622, 1.0
    %v1624 = vmul.f32 %v1623, 0.5
    %v1625 = vadd.f32 %v1477, %v1548
    %v1626 = vmul.f32 %v1625, 0.5
    %v1627 = vtanh.pop %v1626
    %v1628 = vadd.f32 %v1627, 1.0
    %v1629 = vmul.f32 %v1628, 0.5
    %v1630 = vadd.f32 %v1617, %v592
    %v1631 = vmul.f32 %v1624, %v1630
    %v1632 = vadd.f32 %v1478, %v1631
    %v1633 = vtanh.pop %v1632
    %v1634 = vsub.f32 1.0, %v1629
    %v1635 = vmul.f32 %v1634, %v1633
    %v1636 = vmul.f32 %v1629, %v1474
    %v1637 = vadd.f32 %v1635, %v1636
    %vm1638 = vcmp.gt.s32.totalorder %v142, 6
    %v1639 = vsel %vm1638, 1, 0
    %1640 = vset.pattern.permute.xlu0 0
    %1641 = vperm.xlu0 %1640, %v1639
    %v1642 = vpop.permute.xlu0 %1641
    %vm1643 = vcmp.eq.s32.totalorder %v1642, 1
    %v1644 = vsel %vm1643, %v1637, 0.0
    %s1645 = scalar_lea.vmem [#allocation9], 48
    %1646 = vst [vmem:[%s1645] sm:$0xff] %v1644
    %v1647 = vsel %vm1643, %v1637, %v1474
    %s1648 = scalar_lea.vmem [#allocation2], 168
    %v1649 = vld [vmem:[%s1648] sm:$0xff]
    %v1650 = vld [vmem:[%s1648 + $0x8] sm:$0xff]
    %v1651 = vld [vmem:[%s1648 + $0x10] sm:$0xff]
    %1652 = vmatprep.subr.mxu0 %v93
    %1653 = vmatpush1.msra.mxu0 %v92
    %1654 = vmatprep.subr.mxu0 %v96
    %1655 = vmatpush1.msra.mxu0 %v95
    %1656 = vmatprep.subr.mxu0 %v99
    %1657 = vmatpush1.msra.mxu0 %v98
    %1658 = vmatprep.subr.mxu0 %v102
    %1659 = vmatpush1.msra.mxu0 %v101
    %1660 = vmatprep.subr.mxu0 %v105
    %1661 = vmatpush1.msra.mxu0 %v104
    %1662 = vmatprep.subr.mxu0 %v108
    %1663 = vmatpush1.msra.mxu0 %v107
    %1664 = vmatprep.subr.mxu0 %v111
    %1665 = vmatpush1.msra.mxu0 %v110
    %1666 = vmatprep.subr.mxu0 %v114
    %1667 = vmatpush1.msra.mxu0 %v113
    %1668 = vmatprep.subr.mxu0 %v117
    %1669 = vmatpush1.msra.mxu0 %v116
    %1670 = vmatprep.subr.mxu0 %v120
    %1671 = vmatpush1.msra.mxu0 %v119
    %1672 = vmatprep.subr.mxu0 %v123
    %1673 = vmatpush1.msra.mxu0 %v122
    %1674 = vmatprep.subr.mxu0 %v126
    %1675 = vmatpush1.msra.mxu0 %v125
    %1676 = vmatprep.subr.mxu0 %v129
    %1677 = vmatpush1.msra.mxu0 %v128
    %1678 = vmatprep.subr.mxu0 %v132
    %1679 = vmatpush1.msra.mxu0 %v131
    %1680 = vmatprep.subr.mxu0 %v135
    %1681 = vmatpush1.msra.mxu0 %v134
    %1682 = vmatprep.subr.mxu0 %v138
    %1683 = vmatpush1.msra.mxu0 %v137
    %1684 = vmatprep.subr.mxu0 0.0
    %1685 = vmatpush1.msra.mxu0 0.0
    %1686 = vmatprep.subr.mxu0 0.0
    %1687 = vmatpush1.msra.mxu0 0.0
    %1688 = vmatprep.subr.mxu0 0.0
    %1689 = vmatpush1.msra.mxu0 0.0
    %1690 = vmatprep.subr.mxu0 0.0
    %1691 = vmatpush1.msra.mxu0 0.0
    %1692 = vmatprep.subr.mxu0 0.0
    %1693 = vmatpush1.msra.mxu0 0.0
    %1694 = vmatprep.subr.mxu0 0.0
    %1695 = vmatpush1.msra.mxu0 0.0
    %1696 = vmatprep.subr.mxu0 0.0
    %1697 = vmatpush1.msra.mxu0 0.0
    %1698 = vmatprep.subr.mxu0 0.0
    %1699 = vmatpush1.msra.mxu0 0.0
    %1700 = vmatprep.subr.mxu0 0.0
    %1701 = vmatpush1.msra.mxu0 0.0
    %1702 = vmatprep.subr.mxu0 0.0
    %1703 = vmatpush1.msra.mxu0 0.0
    %1704 = vmatprep.subr.mxu0 0.0
    %1705 = vmatpush1.msra.mxu0 0.0
    %1706 = vmatprep.subr.mxu0 0.0
    %1707 = vmatpush1.msra.mxu0 0.0
    %1708 = vmatprep.subr.mxu0 0.0
    %1709 = vmatpush1.msra.mxu0 0.0
    %1710 = vmatprep.subr.mxu0 0.0
    %1711 = vmatpush1.msra.mxu0 0.0
    %1712 = vmatprep.subr.mxu0 0.0
    %1713 = vmatpush1.msra.mxu0 0.0
    %1714 = vmatprep.subr.mxu0 0.0
    %1715 = vmatpush1.msra.mxu0 0.0
    %1716 = vmatprep.mubr.f32.mxu0 0.0
    %1717 = vmatmul.mubr.f32.gmra.mrb[0].mxu0 %v1647
    %v1718 = vpop.f32.mrb[0].mxu0
    %v1719 = vadd.f32 0.0, %v1718
    %v1720 = vpop.f32.mrb[0].mxu0
    %v1721 = vadd.f32 0.0, %v1720
    %1722 = vdwg.mxu0
    %1723 = vmatprep.subr.mxu0 0.0
    %1724 = vmatpush1.msra.mxu0 %v94
    %1725 = vmatprep.subr.mxu0 0.0
    %1726 = vmatpush1.msra.mxu0 %v97
    %1727 = vmatprep.subr.mxu0 0.0
    %1728 = vmatpush1.msra.mxu0 %v100
    %1729 = vmatprep.subr.mxu0 0.0
    %1730 = vmatpush1.msra.mxu0 %v103
    %1731 = vmatprep.subr.mxu0 0.0
    %1732 = vmatpush1.msra.mxu0 %v106
    %1733 = vmatprep.subr.mxu0 0.0
    %1734 = vmatpush1.msra.mxu0 %v109
    %1735 = vmatprep.subr.mxu0 0.0
    %1736 = vmatpush1.msra.mxu0 %v112
    %1737 = vmatprep.subr.mxu0 0.0
    %1738 = vmatpush1.msra.mxu0 %v115
    %1739 = vmatprep.subr.mxu0 0.0
    %1740 = vmatpush1.msra.mxu0 %v118
    %1741 = vmatprep.subr.mxu0 0.0
    %1742 = vmatpush1.msra.mxu0 %v121
    %1743 = vmatprep.subr.mxu0 0.0
    %1744 = vmatpush1.msra.mxu0 %v124
    %1745 = vmatprep.subr.mxu0 0.0
    %1746 = vmatpush1.msra.mxu0 %v127
    %1747 = vmatprep.subr.mxu0 0.0
    %1748 = vmatpush1.msra.mxu0 %v130
    %1749 = vmatprep.subr.mxu0 0.0
    %1750 = vmatpush1.msra.mxu0 %v133
    %1751 = vmatprep.subr.mxu0 0.0
    %1752 = vmatpush1.msra.mxu0 %v136
    %1753 = vmatprep.subr.mxu0 0.0
    %1754 = vmatpush1.msra.mxu0 %v139
    %1755 = vmatprep.subr.mxu0 0.0
    %1756 = vmatpush1.msra.mxu0 0.0
    %1757 = vmatprep.subr.mxu0 0.0
    %1758 = vmatpush1.msra.mxu0 0.0
    %1759 = vmatprep.subr.mxu0 0.0
    %1760 = vmatpush1.msra.mxu0 0.0
    %1761 = vmatprep.subr.mxu0 0.0
    %1762 = vmatpush1.msra.mxu0 0.0
    %1763 = vmatprep.subr.mxu0 0.0
    %1764 = vmatpush1.msra.mxu0 0.0
    %1765 = vmatprep.subr.mxu0 0.0
    %1766 = vmatpush1.msra.mxu0 0.0
    %1767 = vmatprep.subr.mxu0 0.0
    %1768 = vmatpush1.msra.mxu0 0.0
    %1769 = vmatprep.subr.mxu0 0.0
    %1770 = vmatpush1.msra.mxu0 0.0
    %1771 = vmatprep.subr.mxu0 0.0
    %1772 = vmatpush1.msra.mxu0 0.0
    %1773 = vmatprep.subr.mxu0 0.0
    %1774 = vmatpush1.msra.mxu0 0.0
    %1775 = vmatprep.subr.mxu0 0.0
    %1776 = vmatpush1.msra.mxu0 0.0
    %1777 = vmatprep.subr.mxu0 0.0
    %1778 = vmatpush1.msra.mxu0 0.0
    %1779 = vmatprep.subr.mxu0 0.0
    %1780 = vmatpush1.msra.mxu0 0.0
    %1781 = vmatprep.subr.mxu0 0.0
    %1782 = vmatpush1.msra.mxu0 0.0
    %1783 = vmatprep.subr.mxu0 0.0
    %1784 = vmatpush1.msra.mxu0 0.0
    %1785 = vmatprep.subr.mxu0 0.0
    %1786 = vmatpush1.msra.mxu0 0.0
    %1787 = vmatprep.mubr.f32.mxu0 0.0
    %1788 = vmatmul.mubr.f32.gmra.mrb[0].mxu0 %v1647
    %v1789 = vpop.f32.mrb[0].mxu0
    %v1790 = vadd.f32 0.0, %v1789
    %v1791 = vpop.f32.mrb[0].mxu0
    %1792 = vdwg.mxu0
    %v1793 = vadd.f32 %v1649, %v1719
    %v1794 = vmul.f32 %v1793, 0.5
    %v1795 = vtanh.pop %v1794
    %v1796 = vadd.f32 %v1795, 1.0
    %v1797 = vmul.f32 %v1796, 0.5
    %v1798 = vadd.f32 %v1650, %v1721
    %v1799 = vmul.f32 %v1798, 0.5
    %v1800 = vtanh.pop %v1799
    %v1801 = vadd.f32 %v1800, 1.0
    %v1802 = vmul.f32 %v1801, 0.5
    %v1803 = vadd.f32 %v1790, %v592
    %v1804 = vmul.f32 %v1797, %v1803
    %v1805 = vadd.f32 %v1651, %v1804
    %v1806 = vtanh.pop %v1805
    %v1807 = vsub.f32 1.0, %v1802
    %v1808 = vmul.f32 %v1807, %v1806
    %v1809 = vmul.f32 %v1802, %v1647
    %v1810 = vadd.f32 %v1808, %v1809
    %vm1811 = vcmp.gt.s32.totalorder %v142, 7
    %v1812 = vsel %vm1811, 1, 0
    %1813 = vset.pattern.permute.xlu0 0
    %1814 = vperm.xlu0 %1813, %v1812
    %v1815 = vpop.permute.xlu0 %1814
    %vm1816 = vcmp.eq.s32.totalorder %v1815, 1
    %v1817 = vsel %vm1816, %v1810, 0.0
    %s1818 = scalar_lea.vmem [#allocation9], 56
    %1819 = vst [vmem:[%s1818] sm:$0xff] %v1817
    %v1820 = vsel %vm1816, %v1810, %v1647
    %1821 = vst [vmem:[#allocation10] sm:$0xff] %v1820
    // Predicated region
    $region38: #{tpu_custom_call.1} parent=1 // pred_check
      _
    $region39: #{tpu_custom_call.1} parent=1 // pred_check_branch
      %1823 = sbr.rel (0) target = $region41
    $region40: #{tpu_custom_call.1} parent=1 // pred_region
      %s1825 = ssub.s32 1024, 1024
      %1826 = vsyncadd [#allocation5], %s1825
      %s1827 = sshll.u32 [#allocation9], 4
      %s1828 = int_to_ptr.vmem [resolvable:$true] %s1827
      %1833 = dma.vmem_to_hbm [thread:$0]  %s1828, 1024, %s6, [#allocation5], 128, 128, 8
    $region41: #{tpu_custom_call.1} parent=1 // pred_fallthru
      _
    // Predicated region
    $region42: #{tpu_custom_call.1} parent=1 // pred_check
      _
    $region43: #{tpu_custom_call.1} parent=1 // pred_check_branch
      %1835 = sbr.rel (0) target = $region45
    $region44: #{tpu_custom_call.1} parent=1 // pred_region
      %s1837 = ssub.s32 128, 128
      %1838 = vsyncadd [#allocation11], %s1837
      %s1840 = sshll.u32 [#allocation10], 4
      %s1841 = int_to_ptr.vmem [resolvable:$true] %s1840
      %1843 = dma.vmem_to_hbm [thread:$0]  %s1841, 128, %s7, [#allocation11]
    $region45: #{tpu_custom_call.1} parent=1 // pred_fallthru
      _
    // Predicated region
    $region46: #{tpu_custom_call.1} parent=1 // pred_check
      _
    $region47: #{tpu_custom_call.1} parent=1 // pred_check_branch
      %1845 = sbr.rel (0) target = $region49
    $region48: #{tpu_custom_call.1} parent=1 // pred_region
      %1846 = dma.done [#allocation5], 1024
    $region49: #{tpu_custom_call.1} parent=1 // pred_fallthru
      _
    // Predicated region
    $region50: #{tpu_custom_call.1} parent=1 // pred_check
      _
    $region51: #{tpu_custom_call.1} parent=1 // pred_check_branch
      %1848 = sbr.rel (0) target = $region53
    $region52: #{tpu_custom_call.1} parent=1 // pred_region
      %1849 = dma.done [#allocation11], 128
    $region53: #{tpu_custom_call.1} parent=1 // pred_fallthru
      _
    %1850 = vsyncpa [#allocation4], 1
    %1851 = vsyncpa [#allocation7], 1
    %1852 = vsyncpa [#allocation5], 1
    %1853 = vsyncpa [#allocation11], 1

</llo_original>
